<compile_context>
chip_gen: v6e
topology: v6e:2x2x1
jax: 0.10.0
libtpu: 0.0.40
codegen_flags: <defaults>
</compile_context>

<pallas_src>
import math

import jax
import jax.numpy as jnp
from jax.experimental import pallas as pl
from jax.experimental.pallas import tpu as pltpu


DELTA = 0.001
LANE = 128


def _round_up(x, m):
    return (x + m - 1) // m * m


# --------------------------------------------------------------------------
# Kernel 1: Gabor weight generation, lane-dense.
# Inputs are pre-plumbed to (R, O_pad) / (R, 1) with R = kh*kw*Cin rows in
# (dy, dx, cin) order and O_pad = round_up(Cout, 128) lanes, so the output is
# exactly the flattened-HWIO, lane-dense weight matrix the conv consumes.
# --------------------------------------------------------------------------
def gabor_weight_kernel(freq_ref, theta_ref, sigma_ref, psi_ref,
                        xg_ref, yg_ref, w_ref):
    freq = freq_ref[...]      # (R, O_pad)
    theta = theta_ref[...]    # (R, O_pad)
    sigma = sigma_ref[...]    # (R, O_pad)
    psi = psi_ref[...]        # (R, O_pad)
    x = xg_ref[...]           # (R, 1)   broadcasts over lanes
    y = yg_ref[...]           # (R, 1)

    cos_t = jnp.cos(theta)
    sin_t = jnp.sin(theta)
    rotx = x * cos_t + y * sin_t
    roty = -x * sin_t + y * cos_t
    g = jnp.exp(-0.5 * ((rotx * rotx + roty * roty) / (sigma + DELTA) ** 2))
    g = g * jnp.cos(freq * rotx + psi)
    g = g / (2.0 * math.pi * sigma * sigma)
    w_ref[...] = g


# --------------------------------------------------------------------------
# Kernel 2: im2col matmul.  One MXU dot per grid step:
#   (TM, kh*kw*Cin) @ (kh*kw*Cin, O_pad) -> (TM, O_pad), lane-dense output.
# --------------------------------------------------------------------------
def im2col_matmul_kernel(p_ref, w_ref, o_ref):
    o_ref[...] = jnp.dot(p_ref[...], w_ref[...],
                         preferred_element_type=jnp.float32).astype(o_ref.dtype)


# --------------------------------------------------------------------------
# Parameter construction (deterministic, mirrors GaborConv2d.__init__).
# --------------------------------------------------------------------------
def init_gabor_params(key, out_channels, in_channels, kernel_size):
    kh, kw = kernel_size
    k_freq, k_theta, k_psi = jax.random.split(key, 3)

    freq_exp = jax.random.randint(k_freq, (out_channels, in_channels), 0, 5)
    freq = (math.pi / 2.0) * (math.sqrt(2.0) ** (-freq_exp)).astype(jnp.float32)
    theta = (math.pi / 8.0) * jax.random.randint(
        k_theta, (out_channels, in_channels), 0, 8).astype(jnp.float32)
    sigma = math.pi / freq
    psi = math.pi * jax.random.uniform(k_psi, (out_channels, in_channels),
                                       dtype=jnp.float32)

    x0 = float(math.ceil(kh / 2.0))
    y0 = float(math.ceil(kw / 2.0))
    lin_a = jnp.linspace(-x0 + 1.0, x0 + 0.0, kh, dtype=jnp.float32)
    lin_b = jnp.linspace(-y0 + 1.0, y0 + 0.0, kw, dtype=jnp.float32)
    # torch.meshgrid default 'ij': y[i,j] = lin_a[i], x[i,j] = lin_b[j]
    yg = jnp.broadcast_to(lin_a[:, None], (kh, kw))
    xg = jnp.broadcast_to(lin_b[None, :], (kh, kw))
    return dict(freq=freq, theta=theta, sigma=sigma, psi=psi, xg=xg, yg=yg)


# --------------------------------------------------------------------------
# Wrapper: GaborConv2d.forward (recompute weights, then run the conv).
# Input/Output are PyTorch-style NCHW; returns (out_nchw, weight_oihw).
# --------------------------------------------------------------------------
def gabor_conv2d_forward(x_nchw, params, kernel_size, row_tile=256):
    kh, kw = kernel_size
    O, I = params["freq"].shape
    KK = kh * kw
    K = KK * I                      # matmul contraction = kh*kw*Cin
    O_pad = _round_up(O, LANE)      # lane-dense output channels

    # --- layout plumbing for kernel 1 (tiny XLA ops, not compute) -----------
    def pad_cols(a, fill):
        return jnp.pad(a, ((0, 0), (0, O_pad - O)), constant_values=fill)

    freq_io = pad_cols(params["freq"].T.astype(jnp.float32), 0.0)     # (I, O_pad)
    theta_io = pad_cols(params["theta"].T.astype(jnp.float32), 0.0)
    sigma_io = pad_cols(params["sigma"].T.astype(jnp.float32), 1.0)   # avoid /0 in pad lanes
    psi_io = pad_cols(params["psi"].T.astype(jnp.float32), 0.0)

    # row r = (dy*kw + dx)*Cin + cin  ->  params indexed by cin = r % Cin,
    # grid indexed by kk = r // Cin.
    freq_r = jnp.tile(freq_io, (KK, 1))          # (K, O_pad)
    theta_r = jnp.tile(theta_io, (KK, 1))
    sigma_r = jnp.tile(sigma_io, (KK, 1))
    psi_r = jnp.tile(psi_io, (KK, 1))
    xg_r = jnp.repeat(params["xg"].reshape(KK).astype(jnp.float32), I).reshape(K, 1)
    yg_r = jnp.repeat(params["yg"].reshape(KK).astype(jnp.float32), I).reshape(K, 1)

    # --- Pallas kernel 1: Gabor weight bank, already MXU/conv-ready ---------
    w_flat = pl.pallas_call(
        gabor_weight_kernel,
        out_shape=jax.ShapeDtypeStruct((K, O_pad), jnp.float32),
    )(freq_r, theta_r, sigma_r, psi_r, xg_r, yg_r)

    # OIHW weight exactly as the PyTorch module stores it (padded lanes dropped).
    weight_oihw = jnp.transpose(w_flat[:, :O].reshape(kh, kw, I, O), (3, 2, 0, 1))

    # --- im2col in the wrapper (ordering matches the weight rows) -----------
    x_nhwc = jnp.transpose(x_nchw, (0, 2, 3, 1)).astype(jnp.float32)
    N, H, W, Cin = x_nhwc.shape
    Ho, Wo = H - kh + 1, W - kw + 1
    patches = jnp.concatenate(
        [x_nhwc[:, dy:dy + Ho, dx:dx + Wo, :]
         for dy in range(kh) for dx in range(kw)],
        axis=-1)                                             # (N, Ho, Wo, K)
    M = N * Ho * Wo
    TM = min(row_tile, _round_up(M, 8))
    M_pad = _round_up(M, TM)
    patches2d = jnp.pad(patches.reshape(M, K), ((0, M_pad - M), (0, 0)))

    # --- Pallas kernel 2: one matmul per row tile, lane-dense output --------
    out2d = pl.pallas_call(
        im2col_matmul_kernel,
        grid=(M_pad // TM,),
        in_specs=[
            pl.BlockSpec((TM, K), lambda i: (i, 0)),
            pl.BlockSpec((K, O_pad), lambda i: (0, 0)),
        ],
        out_specs=pl.BlockSpec((TM, O_pad), lambda i: (i, 0)),
        out_shape=jax.ShapeDtypeStruct((M_pad, O_pad), jnp.float32),
        compiler_params=pltpu.CompilerParams(
            dimension_semantics=("parallel",)),
    )(patches2d, w_flat)

    out_nhwc = out2d[:M, :O].reshape(N, Ho, Wo, O)
    return jnp.transpose(out_nhwc, (0, 3, 1, 2)), weight_oihw


# --------------------------------------------------------------------------
# Pure-JAX reference (for correctness check only).
# --------------------------------------------------------------------------
def reference_forward(x_nchw, params):
    f = params["freq"][:, :, None, None]
    th = params["theta"][:, :, None, None]
    sg = params["sigma"][:, :, None, None]
    ps = params["psi"][:, :, None, None]
    xx = params["xg"][None, None]
    yy = params["yg"][None, None]
    rotx = xx * jnp.cos(th) + yy * jnp.sin(th)
    roty = -xx * jnp.sin(th) + yy * jnp.cos(th)
    g = jnp.exp(-0.5 * ((rotx ** 2 + roty ** 2) / (sg + DELTA) ** 2))
    g = g * jnp.cos(f * rotx + ps)
    g = g / (2.0 * math.pi * sg ** 2)
    out = jax.lax.conv_general_dilated(
        x_nchw.astype(jnp.float32), g, window_strides=(1, 1), padding="VALID",
        dimension_numbers=("NCHW", "OIHW", "NCHW"))
    return out, g


if __name__ == "__main__":
    # Small shapes consistent with the module defaults
    # (stride=1, padding=0, dilation=1, groups=1, bias=False).
    N, Cin, H, W = 2, 4, 16, 16
    Cout, Ksz = 8, 3
    kernel_size = (Ksz, Ksz)

    key = jax.random.PRNGKey(0)
    k_x, k_param = jax.random.split(key)
    x = jax.random.normal(k_x, (N, Cin, H, W), dtype=jnp.float32)
    params = init_gabor_params(k_param, Cout, Cin, kernel_size)

    fwd = jax.jit(gabor_conv2d_forward, static_argnames=("kernel_size", "row_tile"))
    out, weights = fwd(x, params, kernel_size=kernel_size)
    out = jax.block_until_ready(out)

    ref_out, ref_w = reference_forward(x, params)
    assert out.shape == (N, Cout, H - Ksz + 1, W - Ksz + 1), out.shape
    assert jnp.allclose(weights, ref_w, atol=1e-5, rtol=1e-5), "weight mismatch"
    assert jnp.allclose(out, ref_out, atol=1e-4, rtol=1e-4), "conv output mismatch"

    print("KERNEL_OK")
</pallas_src>

<mosaic_0001>
module attributes {stable_mosaic.version = 11 : i64} {
  func.func @im2col_matmul_kernel(%arg0: i32, %arg1: memref<256x36xf32, #tpu.memory_space<vmem>>, %arg2: memref<36x128xf32, #tpu.memory_space<vmem>>, %arg3: memref<256x128xf32, #tpu.memory_space<vmem>>) attributes {dimension_semantics = [#tpu.dimension_semantics<parallel>], iteration_bounds = array<i64: 2>, scalar_prefetch = 0 : i64, scratch_operands = 0 : i64, tpu.core_type = #tpu.core_type<tc>, window_params = [{transform_indices = @transform_0, window_bounds = array<i64: 256, 36>}, {pipeline_mode = #tpu.pipeline_mode<synchronous>, transform_indices = @transform_1, window_bounds = array<i64: 36, 128>}, {transform_indices = @transform_2, window_bounds = array<i64: 256, 128>}]} {
    %c0 = arith.constant 0 : index
    %c0_0 = arith.constant 0 : index
    %0 = vector.load %arg1[%c0, %c0_0] : memref<256x36xf32, #tpu.memory_space<vmem>>, vector<256x36xf32>
    %c0_1 = arith.constant 0 : index
    %c0_2 = arith.constant 0 : index
    %1 = vector.load %arg2[%c0_1, %c0_2] : memref<36x128xf32, #tpu.memory_space<vmem>>, vector<36x128xf32>
    %cst = arith.constant dense<0.000000e+00> : vector<256x128xf32>
    %2 = tpu.matmul %0, %1, %cst {dimension_numbers = #tpu.dot_dimension_numbers<[1], [0], [0], [1], [0, 0, 1, 1], [], []>} : vector<256x36xf32>, vector<36x128xf32>, vector<256x128xf32> -> vector<256x128xf32>
    %c0_3 = arith.constant 0 : index
    %c0_4 = arith.constant 0 : index
    %3 = vector.load %arg3[%c0_3, %c0_4] : memref<256x128xf32, #tpu.memory_space<vmem>>, vector<256x128xf32>
    tpu.vector_store %arg3[%c0_3, %c0_4], %2 {strides = array<i32>} : memref<256x128xf32, #tpu.memory_space<vmem>>, vector<256x128xf32>,
    return
  }
  func.func @transform_0(%arg0: i32) -> (i32, i32) {
    %c0_i32 = arith.constant 0 : i32
    %c0_i32_0 = arith.constant 0 : i32
    return %arg0, %c0_i32 : i32, i32
  }
  func.func @transform_1(%arg0: i32) -> (i32, i32) {
    %c0_i32 = arith.constant 0 : i32
    %c0_i32_0 = arith.constant 0 : i32
    %c0_i32_1 = arith.constant 0 : i32
    return %c0_i32, %c0_i32_0 : i32, i32
  }
  func.func @transform_2(%arg0: i32) -> (i32, i32) {
    %c0_i32 = arith.constant 0 : i32
    %c0_i32_0 = arith.constant 0 : i32
    return %arg0, %c0_i32 : i32, i32
  }
}

module attributes {stable_mosaic.version = 11 : i64} {
  func.func @gabor_weight_kernel(%arg0: memref<36x128xf32, #tpu.memory_space<vmem>>, %arg1: memref<36x128xf32, #tpu.memory_space<vmem>>, %arg2: memref<36x128xf32, #tpu.memory_space<vmem>>, %arg3: memref<36x128xf32, #tpu.memory_space<vmem>>, %arg4: memref<36x1xf32, #tpu.memory_space<vmem>>, %arg5: memref<36x1xf32, #tpu.memory_space<vmem>>, %arg6: memref<36x128xf32, #tpu.memory_space<vmem>>) attributes {dimension_semantics = [], scalar_prefetch = 0 : i64, scratch_operands = 0 : i64, tpu.core_type = #tpu.core_type<tc>} {
    %c0 = arith.constant 0 : index
    %c0_0 = arith.constant 0 : index
    %0 = vector.load %arg0[%c0, %c0_0] : memref<36x128xf32, #tpu.memory_space<vmem>>, vector<36x128xf32>
    %c0_1 = arith.constant 0 : index
    %c0_2 = arith.constant 0 : index
    %1 = vector.load %arg1[%c0_1, %c0_2] : memref<36x128xf32, #tpu.memory_space<vmem>>, vector<36x128xf32>
    %c0_3 = arith.constant 0 : index
    %c0_4 = arith.constant 0 : index
    %2 = vector.load %arg2[%c0_3, %c0_4] : memref<36x128xf32, #tpu.memory_space<vmem>>, vector<36x128xf32>
    %c0_5 = arith.constant 0 : index
    %c0_6 = arith.constant 0 : index
    %3 = vector.load %arg3[%c0_5, %c0_6] : memref<36x128xf32, #tpu.memory_space<vmem>>, vector<36x128xf32>
    %c0_7 = arith.constant 0 : index
    %c0_8 = arith.constant 0 : index
    %4 = vector.load %arg4[%c0_7, %c0_8] : memref<36x1xf32, #tpu.memory_space<vmem>>, vector<36x1xf32>
    %c0_9 = arith.constant 0 : index
    %c0_10 = arith.constant 0 : index
    %5 = vector.load %arg5[%c0_9, %c0_10] : memref<36x1xf32, #tpu.memory_space<vmem>>, vector<36x1xf32>
    %6 = math.cos %1 : vector<36x128xf32>
    %7 = math.sin %1 : vector<36x128xf32>
    %8 = vector.broadcast %4 : vector<36x1xf32> to vector<36x128xf32>
    %9 = arith.mulf %8, %6 : vector<36x128xf32>
    %10 = vector.broadcast %5 : vector<36x1xf32> to vector<36x128xf32>
    %11 = arith.mulf %10, %7 : vector<36x128xf32>
    %12 = arith.addf %9, %11 : vector<36x128xf32>
    %cst = arith.constant 0.000000e+00 : f32
    %13 = vector.broadcast %cst : f32 to vector<36x1xf32>
    %14 = arith.subf %13, %4 : vector<36x1xf32>
    %15 = vector.broadcast %14 : vector<36x1xf32> to vector<36x128xf32>
    %16 = arith.mulf %15, %7 : vector<36x128xf32>
    %17 = vector.broadcast %5 : vector<36x1xf32> to vector<36x128xf32>
    %18 = arith.mulf %17, %6 : vector<36x128xf32>
    %19 = arith.addf %16, %18 : vector<36x128xf32>
    %20 = arith.mulf %12, %12 : vector<36x128xf32>
    %21 = arith.mulf %19, %19 : vector<36x128xf32>
    %22 = arith.addf %20, %21 : vector<36x128xf32>
    %cst_11 = arith.constant 1.000000e-03 : f32
    %23 = vector.broadcast %cst_11 : f32 to vector<36x128xf32>
    %24 = arith.addf %2, %23 : vector<36x128xf32>
    %25 = arith.mulf %24, %24 : vector<36x128xf32>
    %26 = arith.divf %22, %25 : vector<36x128xf32>
    %cst_12 = arith.constant -5.000000e-01 : f32
    %27 = vector.broadcast %cst_12 : f32 to vector<36x128xf32>
    %28 = arith.mulf %27, %26 : vector<36x128xf32>
    %29 = math.exp %28 : vector<36x128xf32>
    %30 = arith.mulf %0, %12 : vector<36x128xf32>
    %31 = arith.addf %30, %3 : vector<36x128xf32>
    %32 = math.cos %31 : vector<36x128xf32>
    %33 = arith.mulf %29, %32 : vector<36x128xf32>
    %cst_13 = arith.constant 6.28318548 : f32
    %34 = vector.broadcast %cst_13 : f32 to vector<36x128xf32>
    %35 = arith.mulf %34, %2 : vector<36x128xf32>
    %36 = arith.mulf %35, %2 : vector<36x128xf32>
    %37 = arith.divf %33, %36 : vector<36x128xf32>
    %c0_14 = arith.constant 0 : index
    %c0_15 = arith.constant 0 : index
    %38 = vector.load %arg6[%c0_14, %c0_15] : memref<36x128xf32, #tpu.memory_space<vmem>>, vector<36x128xf32>
    tpu.vector_store %arg6[%c0_14, %c0_15], %37 {strides = array<i32>} : memref<36x128xf32, #tpu.memory_space<vmem>>, vector<36x128xf32>,
    return
  }
}

</mosaic_0001>

<llo_original>
// kernel: tile.24
$region0: #{tile.24}
  %s0 = inlined_call_operand.vmem [shape: f32[9,4,128], index: 0, kind: input, shape index: {}]
  %s1 = inlined_call_operand.vmem [shape: f32[36,128], index: 1, kind: output, shape index: {}]
  $region1: #{tile.24} parent=0
    #allocation0 [shape = 'u8[36864]{0}', space=vmem, size = 0x9000, scoped, tag = 'scoped mem for input reshape']
    %s3 = sshll.u32 1, 4
    %s4 = ssub.s32 %s3, 1
    %s5 = smul.addr 4, 8
    %s6 = scalar_lea.vmem %s0, %s5
    %v7 = vld [vmem:[%s6] sm:%s4]
    %s8 = scalar_lea.vmem [#allocation0], 64
    %9 = vst [vmem:[%s8] sm:%s4] %v7
    %s10 = smul.addr 4, 7
    %s11 = scalar_lea.vmem %s0, %s10
    %v12 = vld [vmem:[%s11] sm:%s4]
    %s13 = scalar_lea.vmem [#allocation0], 56
    %14 = vst [vmem:[%s13] sm:%s4] %v12
    %s15 = smul.addr 4, 6
    %s16 = scalar_lea.vmem %s0, %s15
    %v17 = vld [vmem:[%s16] sm:%s4]
    %s18 = scalar_lea.vmem [#allocation0], 48
    %19 = vst [vmem:[%s18] sm:%s4] %v17
    %s20 = smul.addr 4, 5
    %s21 = scalar_lea.vmem %s0, %s20
    %v22 = vld [vmem:[%s21] sm:%s4]
    %s23 = scalar_lea.vmem [#allocation0], 40
    %24 = vst [vmem:[%s23] sm:%s4] %v22
    %s25 = smul.addr 4, 4
    %s26 = scalar_lea.vmem %s0, %s25
    %v27 = vld [vmem:[%s26] sm:%s4]
    %s28 = scalar_lea.vmem [#allocation0], 32
    %29 = vst [vmem:[%s28] sm:%s4] %v27
    %s30 = smul.addr 4, 3
    %s31 = scalar_lea.vmem %s0, %s30
    %v32 = vld [vmem:[%s31] sm:%s4]
    %s33 = scalar_lea.vmem [#allocation0], 24
    %34 = vst [vmem:[%s33] sm:%s4] %v32
    %s35 = smul.addr 4, 2
    %s36 = scalar_lea.vmem %s0, %s35
    %v37 = vld [vmem:[%s36] sm:%s4]
    %s38 = scalar_lea.vmem [#allocation0], 16
    %39 = vst [vmem:[%s38] sm:%s4] %v37
    %s40 = scalar_lea.vmem %s0, 4
    %v41 = vld [vmem:[%s40] sm:%s4]
    %s42 = scalar_lea.vmem [#allocation0], 8
    %43 = vst [vmem:[%s42] sm:%s4] %v41
    %v44 = vld [vmem:[%s0] sm:%s4]
    %45 = vst [vmem:[#allocation0] sm:%s4] %v44
    %v46 = vld [vmem:[#allocation0] sm:$0xf]
    %47 = vst [vmem:[%s1] sm:$0xf] %v46
    %s48 = scalar_lea.vmem [#allocation0], 8
    %v49 = vld [vmem:[%s48] sm:$0xf]
    %s50 = scalar_lea.vmem %s1, 4
    %51 = vst [vmem:[%s50] sm:$0xf] %v49
    %s52 = scalar_lea.vmem [#allocation0], 16
    %v53 = vld [vmem:[%s52] sm:$0xf]
    %s54 = scalar_lea.vmem %s1, 8
    %55 = vst [vmem:[%s54] sm:$0xf] %v53
    %s56 = scalar_lea.vmem [#allocation0], 24
    %v57 = vld [vmem:[%s56] sm:$0xf]
    %s58 = scalar_lea.vmem %s1, 12
    %59 = vst [vmem:[%s58] sm:$0xf] %v57
    %s60 = scalar_lea.vmem [#allocation0], 32
    %v61 = vld [vmem:[%s60] sm:$0xf]
    %s62 = scalar_lea.vmem %s1, 16
    %63 = vst [vmem:[%s62] sm:$0xf] %v61
    %s64 = scalar_lea.vmem [#allocation0], 40
    %v65 = vld [vmem:[%s64] sm:$0xf]
    %s66 = scalar_lea.vmem %s1, 20
    %67 = vst [vmem:[%s66] sm:$0xf] %v65
    %s68 = scalar_lea.vmem [#allocation0], 48
    %v69 = vld [vmem:[%s68] sm:$0xf]
    %s70 = scalar_lea.vmem %s1, 24
    %71 = vst [vmem:[%s70] sm:$0xf] %v69
    %s72 = scalar_lea.vmem [#allocation0], 56
    %v73 = vld [vmem:[%s72] sm:$0xf]
    %s74 = scalar_lea.vmem %s1, 28
    %75 = vst [vmem:[%s74] sm:$0xf] %v73
    %s76 = scalar_lea.vmem [#allocation0], 64
    %v77 = vld [vmem:[%s76] sm:$0xf]
    %s78 = scalar_lea.vmem %s1, 32
    %79 = vst [vmem:[%s78] sm:$0xf] %v77

// kernel: gabor_conv2d_forward.2
$region0: #{gabor_conv2d_forward.2}
  #allocation0 [shape = 'u32[]', space=smem, size = 0x4, offset = 0x4, fixed_abs, tag = 'smem constant byte address 0x4 - core index']
  #allocation1 [shape = 'u32[144,128]{1,0:T(1,128)}', space=vmem, size = 0x12000, scoped, tag = 'internal scratch']
  %s0 = inlined_call_operand.vmem [shape: f32[36,128], index: 0, kind: input, shape index: {}]
  %s1 = inlined_call_operand.vmem [shape: f32[36,128], index: 1, kind: input, shape index: {}]
  %s2 = inlined_call_operand.vmem [shape: f32[36,128], index: 2, kind: input, shape index: {}]
  %s3 = inlined_call_operand.vmem [shape: f32[36,128], index: 3, kind: input, shape index: {}]
  %s4 = inlined_call_operand.vmem [shape: f32[36,1], index: 4, kind: input, shape index: {}]
  %s5 = inlined_call_operand.vmem [shape: f32[36,1], index: 5, kind: input, shape index: {}]
  %s6 = inlined_call_operand.vmem [shape: f32[36,128], index: 6, kind: output, shape index: {}]
  %s7 = sld [smem:[#allocation0]]
  $region34: #{gabor_conv2d_forward.2} parent=0
    _
  %s9 = ssub.s32 1, %s7
  %s10 = scalar_select 0, %s9, %s7
  // Predicated region
  $region2: #{gabor_conv2d_forward.2} parent=0 // pred_check
    _
  $region3: #{gabor_conv2d_forward.2} parent=0 // pred_check_branch
    %12 = sbr.rel (0) target = $region5
  $region4: #{gabor_conv2d_forward.2} parent=0 // pred_region
    _
  $region5: #{gabor_conv2d_forward.2} parent=0 // pred_fallthru
    _
  // Predicated region
  $region6: #{gabor_conv2d_forward.2} parent=0 // pred_check
    _
  $region7: #{gabor_conv2d_forward.2} parent=0 // pred_check_branch
    %14 = sbr.rel (0) target = $region9
  $region8: #{gabor_conv2d_forward.2} parent=0 // pred_region
    _
  $region9: #{gabor_conv2d_forward.2} parent=0 // pred_fallthru
    _
  // Predicated region
  $region10: #{gabor_conv2d_forward.2} parent=0 // pred_check
    _
  $region11: #{gabor_conv2d_forward.2} parent=0 // pred_check_branch
    %16 = sbr.rel (0) target = $region13
  $region12: #{gabor_conv2d_forward.2} parent=0 // pred_region
    _
  $region13: #{gabor_conv2d_forward.2} parent=0 // pred_fallthru
    _
  // Predicated region
  $region14: #{gabor_conv2d_forward.2} parent=0 // pred_check
    _
  $region15: #{gabor_conv2d_forward.2} parent=0 // pred_check_branch
    %18 = sbr.rel (0) target = $region17
  $region16: #{gabor_conv2d_forward.2} parent=0 // pred_region
    _
  $region17: #{gabor_conv2d_forward.2} parent=0 // pred_fallthru
    _
  // Predicated region
  $region18: #{gabor_conv2d_forward.2} parent=0 // pred_check
    _
  $region19: #{gabor_conv2d_forward.2} parent=0 // pred_check_branch
    %20 = sbr.rel (0) target = $region21
  $region20: #{gabor_conv2d_forward.2} parent=0 // pred_region
    _
  $region21: #{gabor_conv2d_forward.2} parent=0 // pred_fallthru
    _
  // Predicated region
  $region22: #{gabor_conv2d_forward.2} parent=0 // pred_check
    _
  $region23: #{gabor_conv2d_forward.2} parent=0 // pred_check_branch
    %22 = sbr.rel (0) target = $region25
  $region24: #{gabor_conv2d_forward.2} parent=0 // pred_region
    _
  $region25: #{gabor_conv2d_forward.2} parent=0 // pred_fallthru
    _
  %v23 = vld [vmem:[%s0] sm:$0xff]
  %v24 = vld [vmem:[%s0 + $0x8] sm:$0xff]
  %v25 = vld [vmem:[%s0 + $0x10] sm:$0xff]
  %v26 = vld [vmem:[%s0 + $0x18] sm:$0xff]
  %v27 = vld [vmem:[%s0 + $0x20] sm:$0xf]
  %v28 = vld [vmem:[%s1] sm:$0xff]
  %v29 = vld [vmem:[%s1 + $0x8] sm:$0xff]
  %v30 = vld [vmem:[%s1 + $0x10] sm:$0xff]
  %v31 = vld [vmem:[%s1 + $0x18] sm:$0xff]
  %v32 = vld [vmem:[%s1 + $0x20] sm:$0xf]
  %v33 = vld [vmem:[%s2] sm:$0xff]
  %v34 = vld [vmem:[%s2 + $0x8] sm:$0xff]
  %v35 = vld [vmem:[%s2 + $0x10] sm:$0xff]
  %v36 = vld [vmem:[%s2 + $0x18] sm:$0xff]
  %v37 = vld [vmem:[%s2 + $0x20] sm:$0xf]
  %v38 = vld [vmem:[%s3] sm:$0xff]
  %v39 = vld [vmem:[%s3 + $0x8] sm:$0xff]
  %v40 = vld [vmem:[%s3 + $0x10] sm:$0xff]
  %v41 = vld [vmem:[%s3 + $0x18] sm:$0xff]
  %v42 = vld [vmem:[%s3 + $0x20] sm:$0xf]
  %v43 = vld [vmem:[%s4] sm:$0xff]
  %v44 = vld [vmem:[%s4 + $0x8] sm:$0xff]
  %v45 = vld [vmem:[%s4 + $0x10] sm:$0xff]
  %v46 = vld [vmem:[%s4 + $0x18] sm:$0xff]
  %v47 = vld [vmem:[%s4 + $0x20] sm:$0xf]
  %v48 = vld [vmem:[%s5] sm:$0xff]
  %v49 = vld [vmem:[%s5 + $0x8] sm:$0xff]
  %v50 = vld [vmem:[%s5 + $0x10] sm:$0xff]
  %v51 = vld [vmem:[%s5 + $0x18] sm:$0xff]
  %v52 = vld [vmem:[%s5 + $0x20] sm:$0xf]
  %v53 = vand.u32 2147483647, %v28
  %vm54 = vcmp.le.f32.partialorder %v53, 0.7853982
  %vm55 = vcmp.lt.s32.totalorder %v28, 0
  %v56 = vand.u32 %v28, 2139095040
  %v57 = vshrl.u32 %v56, 23
  %v58 = vsub.s32 %v57, 127
  %v59 = vand.u32 2147483647, %v28
  %v60 = vand.u32 %v59, 8388607
  %v61 = vor.u32 %v60, 8388608
  %v62 = vsub.s32 0, %v61
  %v63 = vadd.s32 %v58, 1
  %vm64 = vcmp.gt.s32.totalorder %v63, 0
  %v65 = vsel %vm64, %v63, 0
  %v66 = vshrl.u32 %v65, 5
  %v67 = vand.u32 %v65, 31
  %v68 = vsub.s32 32, %v67
  %v69 = vshrl.u32 683565275, %v68
  %v70 = vshll.u32 683565275, %v67
  %v71 = vshrl.u32 2475754826, %v68
  %v72 = vor.u32 %v70, %v71
  %v73 = vshll.u32 2475754826, %v67
  %v74 = vshrl.u32 2131351028, %v68
  %v75 = vor.u32 %v73, %v74
  %v76 = vshll.u32 2131351028, %v67
  %v77 = vshrl.u32 2102212464, %v68
  %v78 = vor.u32 %v76, %v77
  %v79 = vshll.u32 2102212464, %v67
  %v80 = vshrl.u32 920167782, %v68
  %v81 = vor.u32 %v79, %v80
  %v82 = vshll.u32 920167782, %v67
  %v83 = vshrl.u32 1326507024, %v68
  %v84 = vor.u32 %v82, %v83
  %vm85 = vcmp.lt.s32.totalorder %v66, 1
  %vm86 = vcmp.lt.s32.totalorder %v66, 2
  %vm87 = vcmp.lt.s32.totalorder %v66, 3
  %vm88 = vcmp.lt.s32.totalorder %v66, 4
  %v89 = vsel %vm85, %v69, %v72
  %v90 = vsel %vm88, %v78, 2102212464
  %v91 = vsel %vm87, %v75, %v90
  %v92 = vsel %vm86, %v89, %v91
  %v93 = vsel %vm85, %v72, %v75
  %v94 = vsel %vm88, %v81, 920167782
  %v95 = vsel %vm87, %v78, %v94
  %v96 = vsel %vm86, %v93, %v95
  %v97 = vsel %vm85, %v75, %v78
  %v98 = vsel %vm88, %v84, 1326507024
  %v99 = vsel %vm87, %v81, %v98
  %v100 = vsel %vm86, %v97, %v99
  %v101 = vshll.u32 %v61, 8
  %v102 = vmul.u32.u64.compose %v101, %v100
  %v103 = vextract.low.u32 %v102
  %v104 = vextract.high.u32 %v102
  %v105 = vmul.u32.u64.compose %v101, %v96
  %v106 = vextract.low.u32 %v105
  %v107 = vextract.high.u32 %v105
  %v108 = vmul.u32 %v101, %v92
  %v109 = vadd.s32 %v104, %v106
  %vm110 = vc.u32 %v104, %v106
  %v111 = vadd.s32 %v107, 1
  %v112 = vsel %vm110, %v111, %v107
  %v113 = vadd.s32 %v108, %v112
  %v114 = vadd.s32 %v113, 536870912
  %v115 = vshrl.u32 %v114, 30
  %v116 = vshll.u32 %v115, 30
  %v117 = vsub.s32 %v113, %v116
  %vm118 = vcmp.lt.s32.totalorder %v117, 0
  %v119 = vsub.s32 0, %v117
  %v120 = vsel %vm118, %v119, %v117
  %v121 = vclz %v120
  %v122 = vsub.s32 %v121, 2
  %vm123 = vcmp.gt.s32.totalorder 0, %v122
  %v124 = vsel %vm123, 0, %v122
  %v125 = vsub.s32 32, %v124
  %v126 = vshll.u32 %v117, %v124
  %v127 = vshrl.u32 %v109, %v125
  %v128 = vor.u32 %v126, %v127
  %v129 = vsub.s32 4294967266, %v124
  %v130 = vadd.s32 %v129, 127
  %v131 = vshll.u32 %v130, 23
  %v132 = vor.u32 4788187, %v131
  %v133 = vand.u32 2147483647, %v132
  %v135 = vcvt.s32.f32 %v128
  %v136 = vmul.f32 %v135, %v133
  %v137 = vxor.u32 %v136, 2147483648
  %v138 = vsel %vm55, %v137, %v136
  %v139 = vsub.s32 4, %v115
  %v140 = vsel %vm55, %v139, %v115
  %v141 = vsel %vm54, %v28, %v138
  %v142 = vsel %vm54, 0, %v140
  %v143 = vcosq.f32.pop %v141
  %v144 = vsinq.f32.pop %v141
  %vm145 = vweird.f32 %v28
  %v146 = vand.u32 %v142, 3
  %vm147 = vcmp.lt.s32.totalorder %v146, 2
  %vm148 = vcmp.eq.s32.totalorder %v146, 0
  %v149 = vxor.u32 %v144, 2147483648
  %v150 = vsel %vm148, %v143, %v149
  %vm151 = vcmp.eq.s32.totalorder %v146, 2
  %v152 = vxor.u32 %v143, 2147483648
  %v153 = vsel %vm151, %v152, %v144
  %v154 = vsel %vm147, %v150, %v153
  %v155 = vsel %vm145, nan, %v154
  %v156 = vand.u32 2147483647, %v29
  %vm157 = vcmp.le.f32.partialorder %v156, 0.7853982
  %vm158 = vcmp.lt.s32.totalorder %v29, 0
  %v159 = vand.u32 %v29, 2139095040
  %v160 = vshrl.u32 %v159, 23
  %v161 = vsub.s32 %v160, 127
  %v162 = vand.u32 2147483647, %v29
  %v163 = vand.u32 %v162, 8388607
  %v164 = vor.u32 %v163, 8388608
  %v165 = vsub.s32 0, %v164
  %v166 = vadd.s32 %v161, 1
  %vm167 = vcmp.gt.s32.totalorder %v166, 0
  %v168 = vsel %vm167, %v166, 0
  %v169 = vshrl.u32 %v168, 5
  %v170 = vand.u32 %v168, 31
  %v171 = vsub.s32 32, %v170
  %v172 = vshrl.u32 683565275, %v171
  %v173 = vshll.u32 683565275, %v170
  %v174 = vshrl.u32 2475754826, %v171
  %v175 = vor.u32 %v173, %v174
  %v176 = vshll.u32 2475754826, %v170
  %v177 = vshrl.u32 2131351028, %v171
  %v178 = vor.u32 %v176, %v177
  %v179 = vshll.u32 2131351028, %v170
  %v180 = vshrl.u32 2102212464, %v171
  %v181 = vor.u32 %v179, %v180
  %v182 = vshll.u32 2102212464, %v170
  %v183 = vshrl.u32 920167782, %v171
  %v184 = vor.u32 %v182, %v183
  %v185 = vshll.u32 920167782, %v170
  %v186 = vshrl.u32 1326507024, %v171
  %v187 = vor.u32 %v185, %v186
  %vm188 = vcmp.lt.s32.totalorder %v169, 1
  %vm189 = vcmp.lt.s32.totalorder %v169, 2
  %vm190 = vcmp.lt.s32.totalorder %v169, 3
  %vm191 = vcmp.lt.s32.totalorder %v169, 4
  %v192 = vsel %vm188, %v172, %v175
  %v193 = vsel %vm191, %v181, 2102212464
  %v194 = vsel %vm190, %v178, %v193
  %v195 = vsel %vm189, %v192, %v194
  %v196 = vsel %vm188, %v175, %v178
  %v197 = vsel %vm191, %v184, 920167782
  %v198 = vsel %vm190, %v181, %v197
  %v199 = vsel %vm189, %v196, %v198
  %v200 = vsel %vm188, %v178, %v181
  %v201 = vsel %vm191, %v187, 1326507024
  %v202 = vsel %vm190, %v184, %v201
  %v203 = vsel %vm189, %v200, %v202
  %v204 = vshll.u32 %v164, 8
  %v205 = vmul.u32.u64.compose %v204, %v203
  %v206 = vextract.low.u32 %v205
  %v207 = vextract.high.u32 %v205
  %v208 = vmul.u32.u64.compose %v204, %v199
  %v209 = vextract.low.u32 %v208
  %v210 = vextract.high.u32 %v208
  %v211 = vmul.u32 %v204, %v195
  %v212 = vadd.s32 %v207, %v209
  %vm213 = vc.u32 %v207, %v209
  %v214 = vadd.s32 %v210, 1
  %v215 = vsel %vm213, %v214, %v210
  %v216 = vadd.s32 %v211, %v215
  %v217 = vadd.s32 %v216, 536870912
  %v218 = vshrl.u32 %v217, 30
  %v219 = vshll.u32 %v218, 30
  %v220 = vsub.s32 %v216, %v219
  %vm221 = vcmp.lt.s32.totalorder %v220, 0
  %v222 = vsub.s32 0, %v220
  %v223 = vsel %vm221, %v222, %v220
  %v224 = vclz %v223
  %v225 = vsub.s32 %v224, 2
  %vm226 = vcmp.gt.s32.totalorder 0, %v225
  %v227 = vsel %vm226, 0, %v225
  %v228 = vsub.s32 32, %v227
  %v229 = vshll.u32 %v220, %v227
  %v230 = vshrl.u32 %v212, %v228
  %v231 = vor.u32 %v229, %v230
  %v232 = vsub.s32 4294967266, %v227
  %v233 = vadd.s32 %v232, 127
  %v234 = vshll.u32 %v233, 23
  %v235 = vor.u32 4788187, %v234
  %v236 = vand.u32 2147483647, %v235
  %v238 = vcvt.s32.f32 %v231
  %v239 = vmul.f32 %v238, %v236
  %v240 = vxor.u32 %v239, 2147483648
  %v241 = vsel %vm158, %v240, %v239
  %v242 = vsub.s32 4, %v218
  %v243 = vsel %vm158, %v242, %v218
  %v244 = vsel %vm157, %v29, %v241
  %v245 = vsel %vm157, 0, %v243
  %v246 = vcosq.f32.pop %v244
  %v247 = vsinq.f32.pop %v244
  %vm248 = vweird.f32 %v29
  %v249 = vand.u32 %v245, 3
  %vm250 = vcmp.lt.s32.totalorder %v249, 2
  %vm251 = vcmp.eq.s32.totalorder %v249, 0
  %v252 = vxor.u32 %v247, 2147483648
  %v253 = vsel %vm251, %v246, %v252
  %vm254 = vcmp.eq.s32.totalorder %v249, 2
  %v255 = vxor.u32 %v246, 2147483648
  %v256 = vsel %vm254, %v255, %v247
  %v257 = vsel %vm250, %v253, %v256
  %v258 = vsel %vm248, nan, %v257
  %v259 = vand.u32 2147483647, %v30
  %vm260 = vcmp.le.f32.partialorder %v259, 0.7853982
  %vm261 = vcmp.lt.s32.totalorder %v30, 0
  %v262 = vand.u32 %v30, 2139095040
  %v263 = vshrl.u32 %v262, 23
  %v264 = vsub.s32 %v263, 127
  %v265 = vand.u32 2147483647, %v30
  %v266 = vand.u32 %v265, 8388607
  %v267 = vor.u32 %v266, 8388608
  %v268 = vsub.s32 0, %v267
  %v269 = vadd.s32 %v264, 1
  %vm270 = vcmp.gt.s32.totalorder %v269, 0
  %v271 = vsel %vm270, %v269, 0
  %v272 = vshrl.u32 %v271, 5
  %v273 = vand.u32 %v271, 31
  %v274 = vsub.s32 32, %v273
  %v275 = vshrl.u32 683565275, %v274
  %v276 = vshll.u32 683565275, %v273
  %v277 = vshrl.u32 2475754826, %v274
  %v278 = vor.u32 %v276, %v277
  %v279 = vshll.u32 2475754826, %v273
  %v280 = vshrl.u32 2131351028, %v274
  %v281 = vor.u32 %v279, %v280
  %v282 = vshll.u32 2131351028, %v273
  %v283 = vshrl.u32 2102212464, %v274
  %v284 = vor.u32 %v282, %v283
  %v285 = vshll.u32 2102212464, %v273
  %v286 = vshrl.u32 920167782, %v274
  %v287 = vor.u32 %v285, %v286
  %v288 = vshll.u32 920167782, %v273
  %v289 = vshrl.u32 1326507024, %v274
  %v290 = vor.u32 %v288, %v289
  %vm291 = vcmp.lt.s32.totalorder %v272, 1
  %vm292 = vcmp.lt.s32.totalorder %v272, 2
  %vm293 = vcmp.lt.s32.totalorder %v272, 3
  %vm294 = vcmp.lt.s32.totalorder %v272, 4
  %v295 = vsel %vm291, %v275, %v278
  %v296 = vsel %vm294, %v284, 2102212464
  %v297 = vsel %vm293, %v281, %v296
  %v298 = vsel %vm292, %v295, %v297
  %v299 = vsel %vm291, %v278, %v281
  %v300 = vsel %vm294, %v287, 920167782
  %v301 = vsel %vm293, %v284, %v300
  %v302 = vsel %vm292, %v299, %v301
  %v303 = vsel %vm291, %v281, %v284
  %v304 = vsel %vm294, %v290, 1326507024
  %v305 = vsel %vm293, %v287, %v304
  %v306 = vsel %vm292, %v303, %v305
  %v307 = vshll.u32 %v267, 8
  %v308 = vmul.u32.u64.compose %v307, %v306
  %v309 = vextract.low.u32 %v308
  %v310 = vextract.high.u32 %v308
  %v311 = vmul.u32.u64.compose %v307, %v302
  %v312 = vextract.low.u32 %v311
  %v313 = vextract.high.u32 %v311
  %v314 = vmul.u32 %v307, %v298
  %v315 = vadd.s32 %v310, %v312
  %vm316 = vc.u32 %v310, %v312
  %v317 = vadd.s32 %v313, 1
  %v318 = vsel %vm316, %v317, %v313
  %v319 = vadd.s32 %v314, %v318
  %v320 = vadd.s32 %v319, 536870912
  %v321 = vshrl.u32 %v320, 30
  %v322 = vshll.u32 %v321, 30
  %v323 = vsub.s32 %v319, %v322
  %vm324 = vcmp.lt.s32.totalorder %v323, 0
  %v325 = vsub.s32 0, %v323
  %v326 = vsel %vm324, %v325, %v323
  %v327 = vclz %v326
  %v328 = vsub.s32 %v327, 2
  %vm329 = vcmp.gt.s32.totalorder 0, %v328
  %v330 = vsel %vm329, 0, %v328
  %v331 = vsub.s32 32, %v330
  %v332 = vshll.u32 %v323, %v330
  %v333 = vshrl.u32 %v315, %v331
  %v334 = vor.u32 %v332, %v333
  %v335 = vsub.s32 4294967266, %v330
  %v336 = vadd.s32 %v335, 127
  %v337 = vshll.u32 %v336, 23
  %v338 = vor.u32 4788187, %v337
  %v339 = vand.u32 2147483647, %v338
  %v341 = vcvt.s32.f32 %v334
  %v342 = vmul.f32 %v341, %v339
  %v343 = vxor.u32 %v342, 2147483648
  %v344 = vsel %vm261, %v343, %v342
  %v345 = vsub.s32 4, %v321
  %v346 = vsel %vm261, %v345, %v321
  %v347 = vsel %vm260, %v30, %v344
  %v348 = vsel %vm260, 0, %v346
  %v349 = vcosq.f32.pop %v347
  %v350 = vsinq.f32.pop %v347
  %vm351 = vweird.f32 %v30
  %v352 = vand.u32 %v348, 3
  %vm353 = vcmp.lt.s32.totalorder %v352, 2
  %vm354 = vcmp.eq.s32.totalorder %v352, 0
  %v355 = vxor.u32 %v350, 2147483648
  %v356 = vsel %vm354, %v349, %v355
  %vm357 = vcmp.eq.s32.totalorder %v352, 2
  %v358 = vxor.u32 %v349, 2147483648
  %v359 = vsel %vm357, %v358, %v350
  %v360 = vsel %vm353, %v356, %v359
  %v361 = vsel %vm351, nan, %v360
  %v362 = vand.u32 2147483647, %v31
  %vm363 = vcmp.le.f32.partialorder %v362, 0.7853982
  %vm364 = vcmp.lt.s32.totalorder %v31, 0
  %v365 = vand.u32 %v31, 2139095040
  %v366 = vshrl.u32 %v365, 23
  %v367 = vsub.s32 %v366, 127
  %v368 = vand.u32 2147483647, %v31
  %v369 = vand.u32 %v368, 8388607
  %v370 = vor.u32 %v369, 8388608
  %v371 = vsub.s32 0, %v370
  %v372 = vadd.s32 %v367, 1
  %vm373 = vcmp.gt.s32.totalorder %v372, 0
  %v374 = vsel %vm373, %v372, 0
  %v375 = vshrl.u32 %v374, 5
  %v376 = vand.u32 %v374, 31
  %v377 = vsub.s32 32, %v376
  %v378 = vshrl.u32 683565275, %v377
  %v379 = vshll.u32 683565275, %v376
  %v380 = vshrl.u32 2475754826, %v377
  %v381 = vor.u32 %v379, %v380
  %v382 = vshll.u32 2475754826, %v376
  %v383 = vshrl.u32 2131351028, %v377
  %v384 = vor.u32 %v382, %v383
  %v385 = vshll.u32 2131351028, %v376
  %v386 = vshrl.u32 2102212464, %v377
  %v387 = vor.u32 %v385, %v386
  %v388 = vshll.u32 2102212464, %v376
  %v389 = vshrl.u32 920167782, %v377
  %v390 = vor.u32 %v388, %v389
  %v391 = vshll.u32 920167782, %v376
  %v392 = vshrl.u32 1326507024, %v377
  %v393 = vor.u32 %v391, %v392
  %vm394 = vcmp.lt.s32.totalorder %v375, 1
  %vm395 = vcmp.lt.s32.totalorder %v375, 2
  %vm396 = vcmp.lt.s32.totalorder %v375, 3
  %vm397 = vcmp.lt.s32.totalorder %v375, 4
  %v398 = vsel %vm394, %v378, %v381
  %v399 = vsel %vm397, %v387, 2102212464
  %v400 = vsel %vm396, %v384, %v399
  %v401 = vsel %vm395, %v398, %v400
  %v402 = vsel %vm394, %v381, %v384
  %v403 = vsel %vm397, %v390, 920167782
  %v404 = vsel %vm396, %v387, %v403
  %v405 = vsel %vm395, %v402, %v404
  %v406 = vsel %vm394, %v384, %v387
  %v407 = vsel %vm397, %v393, 1326507024
  %v408 = vsel %vm396, %v390, %v407
  %v409 = vsel %vm395, %v406, %v408
  %v410 = vshll.u32 %v370, 8
  %v411 = vmul.u32.u64.compose %v410, %v409
  %v412 = vextract.low.u32 %v411
  %v413 = vextract.high.u32 %v411
  %v414 = vmul.u32.u64.compose %v410, %v405
  %v415 = vextract.low.u32 %v414
  %v416 = vextract.high.u32 %v414
  %v417 = vmul.u32 %v410, %v401
  %v418 = vadd.s32 %v413, %v415
  %vm419 = vc.u32 %v413, %v415
  %v420 = vadd.s32 %v416, 1
  %v421 = vsel %vm419, %v420, %v416
  %v422 = vadd.s32 %v417, %v421
  %v423 = vadd.s32 %v422, 536870912
  %v424 = vshrl.u32 %v423, 30
  %v425 = vshll.u32 %v424, 30
  %v426 = vsub.s32 %v422, %v425
  %vm427 = vcmp.lt.s32.totalorder %v426, 0
  %v428 = vsub.s32 0, %v426
  %v429 = vsel %vm427, %v428, %v426
  %v430 = vclz %v429
  %v431 = vsub.s32 %v430, 2
  %vm432 = vcmp.gt.s32.totalorder 0, %v431
  %v433 = vsel %vm432, 0, %v431
  %v434 = vsub.s32 32, %v433
  %v435 = vshll.u32 %v426, %v433
  %v436 = vshrl.u32 %v418, %v434
  %v437 = vor.u32 %v435, %v436
  %v438 = vsub.s32 4294967266, %v433
  %v439 = vadd.s32 %v438, 127
  %v440 = vshll.u32 %v439, 23
  %v441 = vor.u32 4788187, %v440
  %v442 = vand.u32 2147483647, %v441
  %v444 = vcvt.s32.f32 %v437
  %v445 = vmul.f32 %v444, %v442
  %v446 = vxor.u32 %v445, 2147483648
  %v447 = vsel %vm364, %v446, %v445
  %v448 = vsub.s32 4, %v424
  %v449 = vsel %vm364, %v448, %v424
  %v450 = vsel %vm363, %v31, %v447
  %v451 = vsel %vm363, 0, %v449
  %v452 = vcosq.f32.pop %v450
  %v453 = vsinq.f32.pop %v450
  %vm454 = vweird.f32 %v31
  %v455 = vand.u32 %v451, 3
  %vm456 = vcmp.lt.s32.totalorder %v455, 2
  %vm457 = vcmp.eq.s32.totalorder %v455, 0
  %v458 = vxor.u32 %v453, 2147483648
  %v459 = vsel %vm457, %v452, %v458
  %vm460 = vcmp.eq.s32.totalorder %v455, 2
  %v461 = vxor.u32 %v452, 2147483648
  %v462 = vsel %vm460, %v461, %v453
  %v463 = vsel %vm456, %v459, %v462
  %v464 = vsel %vm454, nan, %v463
  %v465 = vand.u32 2147483647, %v32
  %vm466 = vcmp.le.f32.partialorder %v465, 0.7853982
  %vm467 = vcmp.lt.s32.totalorder %v32, 0
  %v468 = vand.u32 %v32, 2139095040
  %v469 = vshrl.u32 %v468, 23
  %v470 = vsub.s32 %v469, 127
  %v471 = vand.u32 2147483647, %v32
  %v472 = vand.u32 %v471, 8388607
  %v473 = vor.u32 %v472, 8388608
  %v474 = vsub.s32 0, %v473
  %v475 = vadd.s32 %v470, 1
  %vm476 = vcmp.gt.s32.totalorder %v475, 0
  %v477 = vsel %vm476, %v475, 0
  %v478 = vshrl.u32 %v477, 5
  %v479 = vand.u32 %v477, 31
  %v480 = vsub.s32 32, %v479
  %v481 = vshrl.u32 683565275, %v480
  %v482 = vshll.u32 683565275, %v479
  %v483 = vshrl.u32 2475754826, %v480
  %v484 = vor.u32 %v482, %v483
  %v485 = vshll.u32 2475754826, %v479
  %v486 = vshrl.u32 2131351028, %v480
  %v487 = vor.u32 %v485, %v486
  %v488 = vshll.u32 2131351028, %v479
  %v489 = vshrl.u32 2102212464, %v480
  %v490 = vor.u32 %v488, %v489
  %v491 = vshll.u32 2102212464, %v479
  %v492 = vshrl.u32 920167782, %v480
  %v493 = vor.u32 %v491, %v492
  %v494 = vshll.u32 920167782, %v479
  %v495 = vshrl.u32 1326507024, %v480
  %v496 = vor.u32 %v494, %v495
  %vm497 = vcmp.lt.s32.totalorder %v478, 1
  %vm498 = vcmp.lt.s32.totalorder %v478, 2
  %vm499 = vcmp.lt.s32.totalorder %v478, 3
  %vm500 = vcmp.lt.s32.totalorder %v478, 4
  %v501 = vsel %vm497, %v481, %v484
  %v502 = vsel %vm500, %v490, 2102212464
  %v503 = vsel %vm499, %v487, %v502
  %v504 = vsel %vm498, %v501, %v503
  %v505 = vsel %vm497, %v484, %v487
  %v506 = vsel %vm500, %v493, 920167782
  %v507 = vsel %vm499, %v490, %v506
  %v508 = vsel %vm498, %v505, %v507
  %v509 = vsel %vm497, %v487, %v490
  %v510 = vsel %vm500, %v496, 1326507024
  %v511 = vsel %vm499, %v493, %v510
  %v512 = vsel %vm498, %v509, %v511
  %v513 = vshll.u32 %v473, 8
  %v514 = vmul.u32.u64.compose %v513, %v512
  %v515 = vextract.low.u32 %v514
  %v516 = vextract.high.u32 %v514
  %v517 = vmul.u32.u64.compose %v513, %v508
  %v518 = vextract.low.u32 %v517
  %v519 = vextract.high.u32 %v517
  %v520 = vmul.u32 %v513, %v504
  %v521 = vadd.s32 %v516, %v518
  %vm522 = vc.u32 %v516, %v518
  %v523 = vadd.s32 %v519, 1
  %v524 = vsel %vm522, %v523, %v519
  %v525 = vadd.s32 %v520, %v524
  %v526 = vadd.s32 %v525, 536870912
  %v527 = vshrl.u32 %v526, 30
  %v528 = vshll.u32 %v527, 30
  %v529 = vsub.s32 %v525, %v528
  %vm530 = vcmp.lt.s32.totalorder %v529, 0
  %v531 = vsub.s32 0, %v529
  %v532 = vsel %vm530, %v531, %v529
  %v533 = vclz %v532
  %v534 = vsub.s32 %v533, 2
  %vm535 = vcmp.gt.s32.totalorder 0, %v534
  %v536 = vsel %vm535, 0, %v534
  %v537 = vsub.s32 32, %v536
  %v538 = vshll.u32 %v529, %v536
  %v539 = vshrl.u32 %v521, %v537
  %v540 = vor.u32 %v538, %v539
  %v541 = vsub.s32 4294967266, %v536
  %v542 = vadd.s32 %v541, 127
  %v543 = vshll.u32 %v542, 23
  %v544 = vor.u32 4788187, %v543
  %v545 = vand.u32 2147483647, %v544
  %v547 = vcvt.s32.f32 %v540
  %v548 = vmul.f32 %v547, %v545
  %v549 = vxor.u32 %v548, 2147483648
  %v550 = vsel %vm467, %v549, %v548
  %v551 = vsub.s32 4, %v527
  %v552 = vsel %vm467, %v551, %v527
  %v553 = vsel %vm466, %v32, %v550
  %v554 = vsel %vm466, 0, %v552
  %v555 = vcosq.f32.pop %v553
  %v556 = vsinq.f32.pop %v553
  %vm557 = vweird.f32 %v32
  %v558 = vand.u32 %v554, 3
  %vm559 = vcmp.lt.s32.totalorder %v558, 2
  %vm560 = vcmp.eq.s32.totalorder %v558, 0
  %v561 = vxor.u32 %v556, 2147483648
  %v562 = vsel %vm560, %v555, %v561
  %vm563 = vcmp.eq.s32.totalorder %v558, 2
  %v564 = vxor.u32 %v555, 2147483648
  %v565 = vsel %vm563, %v564, %v556
  %v566 = vsel %vm559, %v562, %v565
  %v567 = vsel %vm557, nan, %v566
  %v568 = vand.u32 2147483647, %v28
  %vm569 = vcmp.le.f32.partialorder %v568, 0.7853982
  %vm570 = vcmp.lt.s32.totalorder %v28, 0
  %v571 = vand.u32 %v28, 2139095040
  %v572 = vshrl.u32 %v571, 23
  %v573 = vsub.s32 %v572, 127
  %v574 = vand.u32 2147483647, %v28
  %v575 = vand.u32 %v574, 8388607
  %v576 = vor.u32 %v575, 8388608
  %v577 = vsub.s32 0, %v576
  %v578 = vadd.s32 %v573, 1
  %vm579 = vcmp.gt.s32.totalorder %v578, 0
  %v580 = vsel %vm579, %v578, 0
  %v581 = vshrl.u32 %v580, 5
  %v582 = vand.u32 %v580, 31
  %v583 = vsub.s32 32, %v582
  %v584 = vshrl.u32 683565275, %v583
  %v585 = vshll.u32 683565275, %v582
  %v586 = vshrl.u32 2475754826, %v583
  %v587 = vor.u32 %v585, %v586
  %v588 = vshll.u32 2475754826, %v582
  %v589 = vshrl.u32 2131351028, %v583
  %v590 = vor.u32 %v588, %v589
  %v591 = vshll.u32 2131351028, %v582
  %v592 = vshrl.u32 2102212464, %v583
  %v593 = vor.u32 %v591, %v592
  %v594 = vshll.u32 2102212464, %v582
  %v595 = vshrl.u32 920167782, %v583
  %v596 = vor.u32 %v594, %v595
  %v597 = vshll.u32 920167782, %v582
  %v598 = vshrl.u32 1326507024, %v583
  %v599 = vor.u32 %v597, %v598
  %vm600 = vcmp.lt.s32.totalorder %v581, 1
  %vm601 = vcmp.lt.s32.totalorder %v581, 2
  %vm602 = vcmp.lt.s32.totalorder %v581, 3
  %vm603 = vcmp.lt.s32.totalorder %v581, 4
  %v604 = vsel %vm600, %v584, %v587
  %v605 = vsel %vm603, %v593, 2102212464
  %v606 = vsel %vm602, %v590, %v605
  %v607 = vsel %vm601, %v604, %v606
  %v608 = vsel %vm600, %v587, %v590
  %v609 = vsel %vm603, %v596, 920167782
  %v610 = vsel %vm602, %v593, %v609
  %v611 = vsel %vm601, %v608, %v610
  %v612 = vsel %vm600, %v590, %v593
  %v613 = vsel %vm603, %v599, 1326507024
  %v614 = vsel %vm602, %v596, %v613
  %v615 = vsel %vm601, %v612, %v614
  %v616 = vshll.u32 %v576, 8
  %v617 = vmul.u32.u64.compose %v616, %v615
  %v618 = vextract.low.u32 %v617
  %v619 = vextract.high.u32 %v617
  %v620 = vmul.u32.u64.compose %v616, %v611
  %v621 = vextract.low.u32 %v620
  %v622 = vextract.high.u32 %v620
  %v623 = vmul.u32 %v616, %v607
  %v624 = vadd.s32 %v619, %v621
  %vm625 = vc.u32 %v619, %v621
  %v626 = vadd.s32 %v622, 1
  %v627 = vsel %vm625, %v626, %v622
  %v628 = vadd.s32 %v623, %v627
  %v629 = vadd.s32 %v628, 536870912
  %v630 = vshrl.u32 %v629, 30
  %v631 = vshll.u32 %v630, 30
  %v632 = vsub.s32 %v628, %v631
  %vm633 = vcmp.lt.s32.totalorder %v632, 0
  %v634 = vsub.s32 0, %v632
  %v635 = vsel %vm633, %v634, %v632
  %v636 = vclz %v635
  %v637 = vsub.s32 %v636, 2
  %vm638 = vcmp.gt.s32.totalorder 0, %v637
  %v639 = vsel %vm638, 0, %v637
  %v640 = vsub.s32 32, %v639
  %v641 = vshll.u32 %v632, %v639
  %v642 = vshrl.u32 %v624, %v640
  %v643 = vor.u32 %v641, %v642
  %v644 = vsub.s32 4294967266, %v639
  %v645 = vadd.s32 %v644, 127
  %v646 = vshll.u32 %v645, 23
  %v647 = vor.u32 4788187, %v646
  %v648 = vand.u32 2147483647, %v647
  %v650 = vcvt.s32.f32 %v643
  %v651 = vmul.f32 %v650, %v648
  %v652 = vxor.u32 %v651, 2147483648
  %v653 = vsel %vm570, %v652, %v651
  %v654 = vsub.s32 4, %v630
  %v655 = vsel %vm570, %v654, %v630
  %v656 = vsel %vm569, %v28, %v653
  %v657 = vsel %vm569, 0, %v655
  %v658 = vcosq.f32.pop %v656
  %v659 = vsinq.f32.pop %v656
  %vm660 = vweird.f32 %v28
  %v661 = vadd.s32 %v657, 3
  %v662 = vand.u32 %v661, 3
  %vm663 = vcmp.lt.s32.totalorder %v662, 2
  %vm664 = vcmp.eq.s32.totalorder %v662, 0
  %v665 = vxor.u32 %v659, 2147483648
  %v666 = vsel %vm664, %v658, %v665
  %vm667 = vcmp.eq.s32.totalorder %v662, 2
  %v668 = vxor.u32 %v658, 2147483648
  %v669 = vsel %vm667, %v668, %v659
  %v670 = vsel %vm663, %v666, %v669
  %v671 = vsel %vm660, nan, %v670
  %v672 = vand.u32 2147483647, %v29
  %vm673 = vcmp.le.f32.partialorder %v672, 0.7853982
  %vm674 = vcmp.lt.s32.totalorder %v29, 0
  %v675 = vand.u32 %v29, 2139095040
  %v676 = vshrl.u32 %v675, 23
  %v677 = vsub.s32 %v676, 127
  %v678 = vand.u32 2147483647, %v29
  %v679 = vand.u32 %v678, 8388607
  %v680 = vor.u32 %v679, 8388608
  %v681 = vsub.s32 0, %v680
  %v682 = vadd.s32 %v677, 1
  %vm683 = vcmp.gt.s32.totalorder %v682, 0
  %v684 = vsel %vm683, %v682, 0
  %v685 = vshrl.u32 %v684, 5
  %v686 = vand.u32 %v684, 31
  %v687 = vsub.s32 32, %v686
  %v688 = vshrl.u32 683565275, %v687
  %v689 = vshll.u32 683565275, %v686
  %v690 = vshrl.u32 2475754826, %v687
  %v691 = vor.u32 %v689, %v690
  %v692 = vshll.u32 2475754826, %v686
  %v693 = vshrl.u32 2131351028, %v687
  %v694 = vor.u32 %v692, %v693
  %v695 = vshll.u32 2131351028, %v686
  %v696 = vshrl.u32 2102212464, %v687
  %v697 = vor.u32 %v695, %v696
  %v698 = vshll.u32 2102212464, %v686
  %v699 = vshrl.u32 920167782, %v687
  %v700 = vor.u32 %v698, %v699
  %v701 = vshll.u32 920167782, %v686
  %v702 = vshrl.u32 1326507024, %v687
  %v703 = vor.u32 %v701, %v702
  %vm704 = vcmp.lt.s32.totalorder %v685, 1
  %vm705 = vcmp.lt.s32.totalorder %v685, 2
  %vm706 = vcmp.lt.s32.totalorder %v685, 3
  %vm707 = vcmp.lt.s32.totalorder %v685, 4
  %v708 = vsel %vm704, %v688, %v691
  %v709 = vsel %vm707, %v697, 2102212464
  %v710 = vsel %vm706, %v694, %v709
  %v711 = vsel %vm705, %v708, %v710
  %v712 = vsel %vm704, %v691, %v694
  %v713 = vsel %vm707, %v700, 920167782
  %v714 = vsel %vm706, %v697, %v713
  %v715 = vsel %vm705, %v712, %v714
  %v716 = vsel %vm704, %v694, %v697
  %v717 = vsel %vm707, %v703, 1326507024
  %v718 = vsel %vm706, %v700, %v717
  %v719 = vsel %vm705, %v716, %v718
  %v720 = vshll.u32 %v680, 8
  %v721 = vmul.u32.u64.compose %v720, %v719
  %v722 = vextract.low.u32 %v721
  %v723 = vextract.high.u32 %v721
  %v724 = vmul.u32.u64.compose %v720, %v715
  %v725 = vextract.low.u32 %v724
  %v726 = vextract.high.u32 %v724
  %v727 = vmul.u32 %v720, %v711
  %v728 = vadd.s32 %v723, %v725
  %vm729 = vc.u32 %v723, %v725
  %v730 = vadd.s32 %v726, 1
  %v731 = vsel %vm729, %v730, %v726
  %v732 = vadd.s32 %v727, %v731
  %v733 = vadd.s32 %v732, 536870912
  %v734 = vshrl.u32 %v733, 30
  %v735 = vshll.u32 %v734, 30
  %v736 = vsub.s32 %v732, %v735
  %vm737 = vcmp.lt.s32.totalorder %v736, 0
  %v738 = vsub.s32 0, %v736
  %v739 = vsel %vm737, %v738, %v736
  %v740 = vclz %v739
  %v741 = vsub.s32 %v740, 2
  %vm742 = vcmp.gt.s32.totalorder 0, %v741
  %v743 = vsel %vm742, 0, %v741
  %v744 = vsub.s32 32, %v743
  %v745 = vshll.u32 %v736, %v743
  %v746 = vshrl.u32 %v728, %v744
  %v747 = vor.u32 %v745, %v746
  %v748 = vsub.s32 4294967266, %v743
  %v749 = vadd.s32 %v748, 127
  %v750 = vshll.u32 %v749, 23
  %v751 = vor.u32 4788187, %v750
  %v752 = vand.u32 2147483647, %v751
  %v754 = vcvt.s32.f32 %v747
  %v755 = vmul.f32 %v754, %v752
  %v756 = vxor.u32 %v755, 2147483648
  %v757 = vsel %vm674, %v756, %v755
  %v758 = vsub.s32 4, %v734
  %v759 = vsel %vm674, %v758, %v734
  %v760 = vsel %vm673, %v29, %v757
  %v761 = vsel %vm673, 0, %v759
  %v762 = vcosq.f32.pop %v760
  %v763 = vsinq.f32.pop %v760
  %vm764 = vweird.f32 %v29
  %v765 = vadd.s32 %v761, 3
  %v766 = vand.u32 %v765, 3
  %vm767 = vcmp.lt.s32.totalorder %v766, 2
  %vm768 = vcmp.eq.s32.totalorder %v766, 0
  %v769 = vxor.u32 %v763, 2147483648
  %v770 = vsel %vm768, %v762, %v769
  %vm771 = vcmp.eq.s32.totalorder %v766, 2
  %v772 = vxor.u32 %v762, 2147483648
  %v773 = vsel %vm771, %v772, %v763
  %v774 = vsel %vm767, %v770, %v773
  %v775 = vsel %vm764, nan, %v774
  %v776 = vand.u32 2147483647, %v30
  %vm777 = vcmp.le.f32.partialorder %v776, 0.7853982
  %vm778 = vcmp.lt.s32.totalorder %v30, 0
  %v779 = vand.u32 %v30, 2139095040
  %v780 = vshrl.u32 %v779, 23
  %v781 = vsub.s32 %v780, 127
  %v782 = vand.u32 2147483647, %v30
  %v783 = vand.u32 %v782, 8388607
  %v784 = vor.u32 %v783, 8388608
  %v785 = vsub.s32 0, %v784
  %v786 = vadd.s32 %v781, 1
  %vm787 = vcmp.gt.s32.totalorder %v786, 0
  %v788 = vsel %vm787, %v786, 0
  %v789 = vshrl.u32 %v788, 5
  %v790 = vand.u32 %v788, 31
  %v791 = vsub.s32 32, %v790
  %v792 = vshrl.u32 683565275, %v791
  %v793 = vshll.u32 683565275, %v790
  %v794 = vshrl.u32 2475754826, %v791
  %v795 = vor.u32 %v793, %v794
  %v796 = vshll.u32 2475754826, %v790
  %v797 = vshrl.u32 2131351028, %v791
  %v798 = vor.u32 %v796, %v797
  %v799 = vshll.u32 2131351028, %v790
  %v800 = vshrl.u32 2102212464, %v791
  %v801 = vor.u32 %v799, %v800
  %v802 = vshll.u32 2102212464, %v790
  %v803 = vshrl.u32 920167782, %v791
  %v804 = vor.u32 %v802, %v803
  %v805 = vshll.u32 920167782, %v790
  %v806 = vshrl.u32 1326507024, %v791
  %v807 = vor.u32 %v805, %v806
  %vm808 = vcmp.lt.s32.totalorder %v789, 1
  %vm809 = vcmp.lt.s32.totalorder %v789, 2
  %vm810 = vcmp.lt.s32.totalorder %v789, 3
  %vm811 = vcmp.lt.s32.totalorder %v789, 4
  %v812 = vsel %vm808, %v792, %v795
  %v813 = vsel %vm811, %v801, 2102212464
  %v814 = vsel %vm810, %v798, %v813
  %v815 = vsel %vm809, %v812, %v814
  %v816 = vsel %vm808, %v795, %v798
  %v817 = vsel %vm811, %v804, 920167782
  %v818 = vsel %vm810, %v801, %v817
  %v819 = vsel %vm809, %v816, %v818
  %v820 = vsel %vm808, %v798, %v801
  %v821 = vsel %vm811, %v807, 1326507024
  %v822 = vsel %vm810, %v804, %v821
  %v823 = vsel %vm809, %v820, %v822
  %v824 = vshll.u32 %v784, 8
  %v825 = vmul.u32.u64.compose %v824, %v823
  %v826 = vextract.low.u32 %v825
  %v827 = vextract.high.u32 %v825
  %v828 = vmul.u32.u64.compose %v824, %v819
  %v829 = vextract.low.u32 %v828
  %v830 = vextract.high.u32 %v828
  %v831 = vmul.u32 %v824, %v815
  %v832 = vadd.s32 %v827, %v829
  %vm833 = vc.u32 %v827, %v829
  %v834 = vadd.s32 %v830, 1
  %v835 = vsel %vm833, %v834, %v830
  %v836 = vadd.s32 %v831, %v835
  %v837 = vadd.s32 %v836, 536870912
  %v838 = vshrl.u32 %v837, 30
  %v839 = vshll.u32 %v838, 30
  %v840 = vsub.s32 %v836, %v839
  %vm841 = vcmp.lt.s32.totalorder %v840, 0
  %v842 = vsub.s32 0, %v840
  %v843 = vsel %vm841, %v842, %v840
  %v844 = vclz %v843
  %v845 = vsub.s32 %v844, 2
  %vm846 = vcmp.gt.s32.totalorder 0, %v845
  %v847 = vsel %vm846, 0, %v845
  %v848 = vsub.s32 32, %v847
  %v849 = vshll.u32 %v840, %v847
  %v850 = vshrl.u32 %v832, %v848
  %v851 = vor.u32 %v849, %v850
  %v852 = vsub.s32 4294967266, %v847
  %v853 = vadd.s32 %v852, 127
  %v854 = vshll.u32 %v853, 23
  %v855 = vor.u32 4788187, %v854
  %v856 = vand.u32 2147483647, %v855
  %v858 = vcvt.s32.f32 %v851
  %v859 = vmul.f32 %v858, %v856
  %v860 = vxor.u32 %v859, 2147483648
  %v861 = vsel %vm778, %v860, %v859
  %v862 = vsub.s32 4, %v838
  %v863 = vsel %vm778, %v862, %v838
  %v864 = vsel %vm777, %v30, %v861
  %v865 = vsel %vm777, 0, %v863
  %v866 = vcosq.f32.pop %v864
  %v867 = vsinq.f32.pop %v864
  %vm868 = vweird.f32 %v30
  %v869 = vadd.s32 %v865, 3
  %v870 = vand.u32 %v869, 3
  %vm871 = vcmp.lt.s32.totalorder %v870, 2
  %vm872 = vcmp.eq.s32.totalorder %v870, 0
  %v873 = vxor.u32 %v867, 2147483648
  %v874 = vsel %vm872, %v866, %v873
  %vm875 = vcmp.eq.s32.totalorder %v870, 2
  %v876 = vxor.u32 %v866, 2147483648
  %v877 = vsel %vm875, %v876, %v867
  %v878 = vsel %vm871, %v874, %v877
  %v879 = vsel %vm868, nan, %v878
  %v880 = vand.u32 2147483647, %v31
  %vm881 = vcmp.le.f32.partialorder %v880, 0.7853982
  %vm882 = vcmp.lt.s32.totalorder %v31, 0
  %v883 = vand.u32 %v31, 2139095040
  %v884 = vshrl.u32 %v883, 23
  %v885 = vsub.s32 %v884, 127
  %v886 = vand.u32 2147483647, %v31
  %v887 = vand.u32 %v886, 8388607
  %v888 = vor.u32 %v887, 8388608
  %v889 = vsub.s32 0, %v888
  %v890 = vadd.s32 %v885, 1
  %vm891 = vcmp.gt.s32.totalorder %v890, 0
  %v892 = vsel %vm891, %v890, 0
  %v893 = vshrl.u32 %v892, 5
  %v894 = vand.u32 %v892, 31
  %v895 = vsub.s32 32, %v894
  %v896 = vshrl.u32 683565275, %v895
  %v897 = vshll.u32 683565275, %v894
  %v898 = vshrl.u32 2475754826, %v895
  %v899 = vor.u32 %v897, %v898
  %v900 = vshll.u32 2475754826, %v894
  %v901 = vshrl.u32 2131351028, %v895
  %v902 = vor.u32 %v900, %v901
  %v903 = vshll.u32 2131351028, %v894
  %v904 = vshrl.u32 2102212464, %v895
  %v905 = vor.u32 %v903, %v904
  %v906 = vshll.u32 2102212464, %v894
  %v907 = vshrl.u32 920167782, %v895
  %v908 = vor.u32 %v906, %v907
  %v909 = vshll.u32 920167782, %v894
  %v910 = vshrl.u32 1326507024, %v895
  %v911 = vor.u32 %v909, %v910
  %vm912 = vcmp.lt.s32.totalorder %v893, 1
  %vm913 = vcmp.lt.s32.totalorder %v893, 2
  %vm914 = vcmp.lt.s32.totalorder %v893, 3
  %vm915 = vcmp.lt.s32.totalorder %v893, 4
  %v916 = vsel %vm912, %v896, %v899
  %v917 = vsel %vm915, %v905, 2102212464
  %v918 = vsel %vm914, %v902, %v917
  %v919 = vsel %vm913, %v916, %v918
  %v920 = vsel %vm912, %v899, %v902
  %v921 = vsel %vm915, %v908, 920167782
  %v922 = vsel %vm914, %v905, %v921
  %v923 = vsel %vm913, %v920, %v922
  %v924 = vsel %vm912, %v902, %v905
  %v925 = vsel %vm915, %v911, 1326507024
  %v926 = vsel %vm914, %v908, %v925
  %v927 = vsel %vm913, %v924, %v926
  %v928 = vshll.u32 %v888, 8
  %v929 = vmul.u32.u64.compose %v928, %v927
  %v930 = vextract.low.u32 %v929
  %v931 = vextract.high.u32 %v929
  %v932 = vmul.u32.u64.compose %v928, %v923
  %v933 = vextract.low.u32 %v932
  %v934 = vextract.high.u32 %v932
  %v935 = vmul.u32 %v928, %v919
  %v936 = vadd.s32 %v931, %v933
  %vm937 = vc.u32 %v931, %v933
  %v938 = vadd.s32 %v934, 1
  %v939 = vsel %vm937, %v938, %v934
  %v940 = vadd.s32 %v935, %v939
  %v941 = vadd.s32 %v940, 536870912
  %v942 = vshrl.u32 %v941, 30
  %v943 = vshll.u32 %v942, 30
  %v944 = vsub.s32 %v940, %v943
  %vm945 = vcmp.lt.s32.totalorder %v944, 0
  %v946 = vsub.s32 0, %v944
  %v947 = vsel %vm945, %v946, %v944
  %v948 = vclz %v947
  %v949 = vsub.s32 %v948, 2
  %vm950 = vcmp.gt.s32.totalorder 0, %v949
  %v951 = vsel %vm950, 0, %v949
  %v952 = vsub.s32 32, %v951
  %v953 = vshll.u32 %v944, %v951
  %v954 = vshrl.u32 %v936, %v952
  %v955 = vor.u32 %v953, %v954
  %v956 = vsub.s32 4294967266, %v951
  %v957 = vadd.s32 %v956, 127
  %v958 = vshll.u32 %v957, 23
  %v959 = vor.u32 4788187, %v958
  %v960 = vand.u32 2147483647, %v959
  %v962 = vcvt.s32.f32 %v955
  %v963 = vmul.f32 %v962, %v960
  %v964 = vxor.u32 %v963, 2147483648
  %v965 = vsel %vm882, %v964, %v963
  %v966 = vsub.s32 4, %v942
  %v967 = vsel %vm882, %v966, %v942
  %v968 = vsel %vm881, %v31, %v965
  %v969 = vsel %vm881, 0, %v967
  %v970 = vcosq.f32.pop %v968
  %v971 = vsinq.f32.pop %v968
  %vm972 = vweird.f32 %v31
  %v973 = vadd.s32 %v969, 3
  %v974 = vand.u32 %v973, 3
  %vm975 = vcmp.lt.s32.totalorder %v974, 2
  %vm976 = vcmp.eq.s32.totalorder %v974, 0
  %v977 = vxor.u32 %v971, 2147483648
  %v978 = vsel %vm976, %v970, %v977
  %vm979 = vcmp.eq.s32.totalorder %v974, 2
  %v980 = vxor.u32 %v970, 2147483648
  %v981 = vsel %vm979, %v980, %v971
  %v982 = vsel %vm975, %v978, %v981
  %v983 = vsel %vm972, nan, %v982
  %v984 = vand.u32 2147483647, %v32
  %vm985 = vcmp.le.f32.partialorder %v984, 0.7853982
  %vm986 = vcmp.lt.s32.totalorder %v32, 0
  %v987 = vand.u32 %v32, 2139095040
  %v988 = vshrl.u32 %v987, 23
  %v989 = vsub.s32 %v988, 127
  %v990 = vand.u32 2147483647, %v32
  %v991 = vand.u32 %v990, 8388607
  %v992 = vor.u32 %v991, 8388608
  %v993 = vsub.s32 0, %v992
  %v994 = vadd.s32 %v989, 1
  %vm995 = vcmp.gt.s32.totalorder %v994, 0
  %v996 = vsel %vm995, %v994, 0
  %v997 = vshrl.u32 %v996, 5
  %v998 = vand.u32 %v996, 31
  %v999 = vsub.s32 32, %v998
  %v1000 = vshrl.u32 683565275, %v999
  %v1001 = vshll.u32 683565275, %v998
  %v1002 = vshrl.u32 2475754826, %v999
  %v1003 = vor.u32 %v1001, %v1002
  %v1004 = vshll.u32 2475754826, %v998
  %v1005 = vshrl.u32 2131351028, %v999
  %v1006 = vor.u32 %v1004, %v1005
  %v1007 = vshll.u32 2131351028, %v998
  %v1008 = vshrl.u32 2102212464, %v999
  %v1009 = vor.u32 %v1007, %v1008
  %v1010 = vshll.u32 2102212464, %v998
  %v1011 = vshrl.u32 920167782, %v999
  %v1012 = vor.u32 %v1010, %v1011
  %v1013 = vshll.u32 920167782, %v998
  %v1014 = vshrl.u32 1326507024, %v999
  %v1015 = vor.u32 %v1013, %v1014
  %vm1016 = vcmp.lt.s32.totalorder %v997, 1
  %vm1017 = vcmp.lt.s32.totalorder %v997, 2
  %vm1018 = vcmp.lt.s32.totalorder %v997, 3
  %vm1019 = vcmp.lt.s32.totalorder %v997, 4
  %v1020 = vsel %vm1016, %v1000, %v1003
  %v1021 = vsel %vm1019, %v1009, 2102212464
  %v1022 = vsel %vm1018, %v1006, %v1021
  %v1023 = vsel %vm1017, %v1020, %v1022
  %v1024 = vsel %vm1016, %v1003, %v1006
  %v1025 = vsel %vm1019, %v1012, 920167782
  %v1026 = vsel %vm1018, %v1009, %v1025
  %v1027 = vsel %vm1017, %v1024, %v1026
  %v1028 = vsel %vm1016, %v1006, %v1009
  %v1029 = vsel %vm1019, %v1015, 1326507024
  %v1030 = vsel %vm1018, %v1012, %v1029
  %v1031 = vsel %vm1017, %v1028, %v1030
  %v1032 = vshll.u32 %v992, 8
  %v1033 = vmul.u32.u64.compose %v1032, %v1031
  %v1034 = vextract.low.u32 %v1033
  %v1035 = vextract.high.u32 %v1033
  %v1036 = vmul.u32.u64.compose %v1032, %v1027
  %v1037 = vextract.low.u32 %v1036
  %v1038 = vextract.high.u32 %v1036
  %v1039 = vmul.u32 %v1032, %v1023
  %v1040 = vadd.s32 %v1035, %v1037
  %vm1041 = vc.u32 %v1035, %v1037
  %v1042 = vadd.s32 %v1038, 1
  %v1043 = vsel %vm1041, %v1042, %v1038
  %v1044 = vadd.s32 %v1039, %v1043
  %v1045 = vadd.s32 %v1044, 536870912
  %v1046 = vshrl.u32 %v1045, 30
  %v1047 = vshll.u32 %v1046, 30
  %v1048 = vsub.s32 %v1044, %v1047
  %vm1049 = vcmp.lt.s32.totalorder %v1048, 0
  %v1050 = vsub.s32 0, %v1048
  %v1051 = vsel %vm1049, %v1050, %v1048
  %v1052 = vclz %v1051
  %v1053 = vsub.s32 %v1052, 2
  %vm1054 = vcmp.gt.s32.totalorder 0, %v1053
  %v1055 = vsel %vm1054, 0, %v1053
  %v1056 = vsub.s32 32, %v1055
  %v1057 = vshll.u32 %v1048, %v1055
  %v1058 = vshrl.u32 %v1040, %v1056
  %v1059 = vor.u32 %v1057, %v1058
  %v1060 = vsub.s32 4294967266, %v1055
  %v1061 = vadd.s32 %v1060, 127
  %v1062 = vshll.u32 %v1061, 23
  %v1063 = vor.u32 4788187, %v1062
  %v1064 = vand.u32 2147483647, %v1063
  %v1066 = vcvt.s32.f32 %v1059
  %v1067 = vmul.f32 %v1066, %v1064
  %v1068 = vxor.u32 %v1067, 2147483648
  %v1069 = vsel %vm986, %v1068, %v1067
  %v1070 = vsub.s32 4, %v1046
  %v1071 = vsel %vm986, %v1070, %v1046
  %v1072 = vsel %vm985, %v32, %v1069
  %v1073 = vsel %vm985, 0, %v1071
  %v1074 = vcosq.f32.pop %v1072
  %v1075 = vsinq.f32.pop %v1072
  %vm1076 = vweird.f32 %v32
  %v1077 = vadd.s32 %v1073, 3
  %v1078 = vand.u32 %v1077, 3
  %vm1079 = vcmp.lt.s32.totalorder %v1078, 2
  %vm1080 = vcmp.eq.s32.totalorder %v1078, 0
  %v1081 = vxor.u32 %v1075, 2147483648
  %v1082 = vsel %vm1080, %v1074, %v1081
  %vm1083 = vcmp.eq.s32.totalorder %v1078, 2
  %v1084 = vxor.u32 %v1074, 2147483648
  %v1085 = vsel %vm1083, %v1084, %v1075
  %v1086 = vsel %vm1079, %v1082, %v1085
  %v1087 = vsel %vm1076, nan, %v1086
  %1089 = vset.pattern.permute.xlu0 0
  %1090 = vperm.xlu0 %1089, %v43
  %v1091 = vpop.permute.xlu0 %1090
  %1094 = vset.pattern.permute.xlu0 0
  %1095 = vperm.xlu0 %1094, %v44
  %v1096 = vpop.permute.xlu0 %1095
  %1099 = vset.pattern.permute.xlu0 0
  %1100 = vperm.xlu0 %1099, %v45
  %v1101 = vpop.permute.xlu0 %1100
  %1104 = vset.pattern.permute.xlu0 0
  %1105 = vperm.xlu0 %1104, %v46
  %v1106 = vpop.permute.xlu0 %1105
  %1109 = vset.pattern.permute.xlu0 0
  %1110 = vperm.xlu0 %1109, %v47
  %v1111 = vpop.permute.xlu0 %1110
  %v1113 = vmul.f32 %v1091, %v155
  %v1114 = vmul.f32 %v1096, %v258
  %v1115 = vmul.f32 %v1101, %v361
  %v1116 = vmul.f32 %v1106, %v464
  %v1117 = vmul.f32 %v1111, %v567
  %1119 = vset.pattern.permute.xlu0 0
  %1120 = vperm.xlu0 %1119, %v48
  %v1121 = vpop.permute.xlu0 %1120
  %1124 = vset.pattern.permute.xlu0 0
  %1125 = vperm.xlu0 %1124, %v49
  %v1126 = vpop.permute.xlu0 %1125
  %1129 = vset.pattern.permute.xlu0 0
  %1130 = vperm.xlu0 %1129, %v50
  %v1131 = vpop.permute.xlu0 %1130
  %1134 = vset.pattern.permute.xlu0 0
  %1135 = vperm.xlu0 %1134, %v51
  %v1136 = vpop.permute.xlu0 %1135
  %1139 = vset.pattern.permute.xlu0 0
  %1140 = vperm.xlu0 %1139, %v52
  %v1141 = vpop.permute.xlu0 %1140
  %v1143 = vmul.f32 %v1121, %v671
  %v1144 = vmul.f32 %v1126, %v775
  %v1145 = vmul.f32 %v1131, %v879
  %v1146 = vmul.f32 %v1136, %v983
  %v1147 = vmul.f32 %v1141, %v1087
  %v1148 = vadd.f32 %v1113, %v1143
  %v1149 = vadd.f32 %v1114, %v1144
  %v1150 = vadd.f32 %v1115, %v1145
  %v1151 = vadd.f32 %v1116, %v1146
  %v1152 = vadd.f32 %v1117, %v1147
  %v1153 = vsub.f32 0.0, %v43
  %v1154 = vsub.f32 0.0, %v44
  %v1155 = vsub.f32 0.0, %v45
  %v1156 = vsub.f32 0.0, %v46
  %v1157 = vsub.f32 0.0, %v47
  %1159 = vset.pattern.permute.xlu0 0
  %1160 = vperm.xlu0 %1159, %v1153
  %v1161 = vpop.permute.xlu0 %1160
  %1164 = vset.pattern.permute.xlu0 0
  %1165 = vperm.xlu0 %1164, %v1154
  %v1166 = vpop.permute.xlu0 %1165
  %1169 = vset.pattern.permute.xlu0 0
  %1170 = vperm.xlu0 %1169, %v1155
  %v1171 = vpop.permute.xlu0 %1170
  %1174 = vset.pattern.permute.xlu0 0
  %1175 = vperm.xlu0 %1174, %v1156
  %v1176 = vpop.permute.xlu0 %1175
  %1179 = vset.pattern.permute.xlu0 0
  %1180 = vperm.xlu0 %1179, %v1157
  %v1181 = vpop.permute.xlu0 %1180
  %v1183 = vmul.f32 %v1161, %v671
  %v1184 = vmul.f32 %v1166, %v775
  %v1185 = vmul.f32 %v1171, %v879
  %v1186 = vmul.f32 %v1176, %v983
  %v1187 = vmul.f32 %v1181, %v1087
  %v1188 = vmul.f32 %v1121, %v155
  %v1189 = vmul.f32 %v1126, %v258
  %v1190 = vmul.f32 %v1131, %v361
  %v1191 = vmul.f32 %v1136, %v464
  %v1192 = vmul.f32 %v1141, %v567
  %v1193 = vadd.f32 %v1183, %v1188
  %v1194 = vadd.f32 %v1184, %v1189
  %v1195 = vadd.f32 %v1185, %v1190
  %v1196 = vadd.f32 %v1186, %v1191
  %v1197 = vadd.f32 %v1187, %v1192
  %v1198 = vmul.f32 %v1148, %v1148
  %v1199 = vmul.f32 %v1149, %v1149
  %v1200 = vmul.f32 %v1150, %v1150
  %v1201 = vmul.f32 %v1151, %v1151
  %v1202 = vmul.f32 %v1152, %v1152
  %v1203 = vmul.f32 %v1193, %v1193
  %v1204 = vmul.f32 %v1194, %v1194
  %v1205 = vmul.f32 %v1195, %v1195
  %v1206 = vmul.f32 %v1196, %v1196
  %v1207 = vmul.f32 %v1197, %v1197
  %v1208 = vadd.f32 %v1198, %v1203
  %v1209 = vadd.f32 %v1199, %v1204
  %v1210 = vadd.f32 %v1200, %v1205
  %v1211 = vadd.f32 %v1201, %v1206
  %v1212 = vadd.f32 %v1202, %v1207
  %v1213 = vadd.f32 %v33, 0.001
  %v1214 = vadd.f32 %v34, 0.001
  %v1215 = vadd.f32 %v35, 0.001
  %v1216 = vadd.f32 %v36, 0.001
  %v1217 = vadd.f32 %v37, 0.001
  %v1218 = vmul.f32 %v1213, %v1213
  %v1219 = vmul.f32 %v1214, %v1214
  %v1220 = vmul.f32 %v1215, %v1215
  %v1221 = vmul.f32 %v1216, %v1216
  %v1222 = vmul.f32 %v1217, %v1217
  %v1223 = vrcp.pop %v1218
  %v1224 = vmul.f32 %v1208, %v1223
  %v1225 = vrcp.pop %v1219
  %v1226 = vmul.f32 %v1209, %v1225
  %v1227 = vrcp.pop %v1220
  %v1228 = vmul.f32 %v1210, %v1227
  %v1229 = vrcp.pop %v1221
  %v1230 = vmul.f32 %v1211, %v1229
  %v1231 = vrcp.pop %v1222
  %v1232 = vmul.f32 %v1212, %v1231
  %v1233 = vmul.f32 %v1224, -0.5
  %v1234 = vmul.f32 %v1226, -0.5
  %v1235 = vmul.f32 %v1228, -0.5
  %v1236 = vmul.f32 %v1230, -0.5
  %v1237 = vmul.f32 %v1232, -0.5
  %v1238 = vmul.f32 %v1233, 1.442695
  %v1239 = vpow.pop %v1238
  %v1240 = vmul.f32 %v1234, 1.442695
  %v1241 = vpow.pop %v1240
  %v1242 = vmul.f32 %v1235, 1.442695
  %v1243 = vpow.pop %v1242
  %v1244 = vmul.f32 %v1236, 1.442695
  %v1245 = vpow.pop %v1244
  %v1246 = vmul.f32 %v1237, 1.442695
  %v1247 = vpow.pop %v1246
  %v1248 = vmul.f32 %v23, %v1148
  %v1249 = vmul.f32 %v24, %v1149
  %v1250 = vmul.f32 %v25, %v1150
  %v1251 = vmul.f32 %v26, %v1151
  %v1252 = vmul.f32 %v27, %v1152
  %v1253 = vadd.f32 %v1248, %v38
  %v1254 = vadd.f32 %v1249, %v39
  %v1255 = vadd.f32 %v1250, %v40
  %v1256 = vadd.f32 %v1251, %v41
  %v1257 = vadd.f32 %v1252, %v42
  %v1258 = vand.u32 2147483647, %v1253
  %vm1259 = vcmp.le.f32.partialorder %v1258, 0.7853982
  %vm1260 = vcmp.lt.s32.totalorder %v1253, 0
  %v1261 = vand.u32 %v1253, 2139095040
  %v1262 = vshrl.u32 %v1261, 23
  %v1263 = vsub.s32 %v1262, 127
  %v1264 = vand.u32 2147483647, %v1253
  %v1265 = vand.u32 %v1264, 8388607
  %v1266 = vor.u32 %v1265, 8388608
  %v1267 = vsub.s32 0, %v1266
  %v1268 = vadd.s32 %v1263, 1
  %vm1269 = vcmp.gt.s32.totalorder %v1268, 0
  %v1270 = vsel %vm1269, %v1268, 0
  %v1271 = vshrl.u32 %v1270, 5
  %v1272 = vand.u32 %v1270, 31
  %v1273 = vsub.s32 32, %v1272
  %v1274 = vshrl.u32 683565275, %v1273
  %v1275 = vshll.u32 683565275, %v1272
  %v1276 = vshrl.u32 2475754826, %v1273
  %v1277 = vor.u32 %v1275, %v1276
  %v1278 = vshll.u32 2475754826, %v1272
  %v1279 = vshrl.u32 2131351028, %v1273
  %v1280 = vor.u32 %v1278, %v1279
  %v1281 = vshll.u32 2131351028, %v1272
  %v1282 = vshrl.u32 2102212464, %v1273
  %v1283 = vor.u32 %v1281, %v1282
  %v1284 = vshll.u32 2102212464, %v1272
  %v1285 = vshrl.u32 920167782, %v1273
  %v1286 = vor.u32 %v1284, %v1285
  %v1287 = vshll.u32 920167782, %v1272
  %v1288 = vshrl.u32 1326507024, %v1273
  %v1289 = vor.u32 %v1287, %v1288
  %vm1290 = vcmp.lt.s32.totalorder %v1271, 1
  %vm1291 = vcmp.lt.s32.totalorder %v1271, 2
  %vm1292 = vcmp.lt.s32.totalorder %v1271, 3
  %vm1293 = vcmp.lt.s32.totalorder %v1271, 4
  %v1294 = vsel %vm1290, %v1274, %v1277
  %v1295 = vsel %vm1293, %v1283, 2102212464
  %v1296 = vsel %vm1292, %v1280, %v1295
  %v1297 = vsel %vm1291, %v1294, %v1296
  %v1298 = vsel %vm1290, %v1277, %v1280
  %v1299 = vsel %vm1293, %v1286, 920167782
  %v1300 = vsel %vm1292, %v1283, %v1299
  %v1301 = vsel %vm1291, %v1298, %v1300
  %v1302 = vsel %vm1290, %v1280, %v1283
  %v1303 = vsel %vm1293, %v1289, 1326507024
  %v1304 = vsel %vm1292, %v1286, %v1303
  %v1305 = vsel %vm1291, %v1302, %v1304
  %v1306 = vshll.u32 %v1266, 8
  %v1307 = vmul.u32.u64.compose %v1306, %v1305
  %v1308 = vextract.low.u32 %v1307
  %v1309 = vextract.high.u32 %v1307
  %v1310 = vmul.u32.u64.compose %v1306, %v1301
  %v1311 = vextract.low.u32 %v1310
  %v1312 = vextract.high.u32 %v1310
  %v1313 = vmul.u32 %v1306, %v1297
  %v1314 = vadd.s32 %v1309, %v1311
  %vm1315 = vc.u32 %v1309, %v1311
  %v1316 = vadd.s32 %v1312, 1
  %v1317 = vsel %vm1315, %v1316, %v1312
  %v1318 = vadd.s32 %v1313, %v1317
  %v1319 = vadd.s32 %v1318, 536870912
  %v1320 = vshrl.u32 %v1319, 30
  %v1321 = vshll.u32 %v1320, 30
  %v1322 = vsub.s32 %v1318, %v1321
  %vm1323 = vcmp.lt.s32.totalorder %v1322, 0
  %v1324 = vsub.s32 0, %v1322
  %v1325 = vsel %vm1323, %v1324, %v1322
  %v1326 = vclz %v1325
  %v1327 = vsub.s32 %v1326, 2
  %vm1328 = vcmp.gt.s32.totalorder 0, %v1327
  %v1329 = vsel %vm1328, 0, %v1327
  %v1330 = vsub.s32 32, %v1329
  %v1331 = vshll.u32 %v1322, %v1329
  %v1332 = vshrl.u32 %v1314, %v1330
  %v1333 = vor.u32 %v1331, %v1332
  %v1334 = vsub.s32 4294967266, %v1329
  %v1335 = vadd.s32 %v1334, 127
  %v1336 = vshll.u32 %v1335, 23
  %v1337 = vor.u32 4788187, %v1336
  %v1338 = vand.u32 2147483647, %v1337
  %v1340 = vcvt.s32.f32 %v1333
  %v1341 = vmul.f32 %v1340, %v1338
  %v1342 = vxor.u32 %v1341, 2147483648
  %v1343 = vsel %vm1260, %v1342, %v1341
  %v1344 = vsub.s32 4, %v1320
  %v1345 = vsel %vm1260, %v1344, %v1320
  %v1346 = vsel %vm1259, %v1253, %v1343
  %v1347 = vsel %vm1259, 0, %v1345
  %v1348 = vcosq.f32.pop %v1346
  %v1349 = vsinq.f32.pop %v1346
  %vm1350 = vweird.f32 %v1253
  %v1351 = vand.u32 %v1347, 3
  %vm1352 = vcmp.lt.s32.totalorder %v1351, 2
  %vm1353 = vcmp.eq.s32.totalorder %v1351, 0
  %v1354 = vxor.u32 %v1349, 2147483648
  %v1355 = vsel %vm1353, %v1348, %v1354
  %vm1356 = vcmp.eq.s32.totalorder %v1351, 2
  %v1357 = vxor.u32 %v1348, 2147483648
  %v1358 = vsel %vm1356, %v1357, %v1349
  %v1359 = vsel %vm1352, %v1355, %v1358
  %v1360 = vsel %vm1350, nan, %v1359
  %v1361 = vand.u32 2147483647, %v1254
  %vm1362 = vcmp.le.f32.partialorder %v1361, 0.7853982
  %vm1363 = vcmp.lt.s32.totalorder %v1254, 0
  %v1364 = vand.u32 %v1254, 2139095040
  %v1365 = vshrl.u32 %v1364, 23
  %v1366 = vsub.s32 %v1365, 127
  %v1367 = vand.u32 2147483647, %v1254
  %v1368 = vand.u32 %v1367, 8388607
  %v1369 = vor.u32 %v1368, 8388608
  %v1370 = vsub.s32 0, %v1369
  %v1371 = vadd.s32 %v1366, 1
  %vm1372 = vcmp.gt.s32.totalorder %v1371, 0
  %v1373 = vsel %vm1372, %v1371, 0
  %v1374 = vshrl.u32 %v1373, 5
  %v1375 = vand.u32 %v1373, 31
  %v1376 = vsub.s32 32, %v1375
  %v1377 = vshrl.u32 683565275, %v1376
  %v1378 = vshll.u32 683565275, %v1375
  %v1379 = vshrl.u32 2475754826, %v1376
  %v1380 = vor.u32 %v1378, %v1379
  %v1381 = vshll.u32 2475754826, %v1375
  %v1382 = vshrl.u32 2131351028, %v1376
  %v1383 = vor.u32 %v1381, %v1382
  %v1384 = vshll.u32 2131351028, %v1375
  %v1385 = vshrl.u32 2102212464, %v1376
  %v1386 = vor.u32 %v1384, %v1385
  %v1387 = vshll.u32 2102212464, %v1375
  %v1388 = vshrl.u32 920167782, %v1376
  %v1389 = vor.u32 %v1387, %v1388
  %v1390 = vshll.u32 920167782, %v1375
  %v1391 = vshrl.u32 1326507024, %v1376
  %v1392 = vor.u32 %v1390, %v1391
  %vm1393 = vcmp.lt.s32.totalorder %v1374, 1
  %vm1394 = vcmp.lt.s32.totalorder %v1374, 2
  %vm1395 = vcmp.lt.s32.totalorder %v1374, 3
  %vm1396 = vcmp.lt.s32.totalorder %v1374, 4
  %v1397 = vsel %vm1393, %v1377, %v1380
  %v1398 = vsel %vm1396, %v1386, 2102212464
  %v1399 = vsel %vm1395, %v1383, %v1398
  %v1400 = vsel %vm1394, %v1397, %v1399
  %v1401 = vsel %vm1393, %v1380, %v1383
  %v1402 = vsel %vm1396, %v1389, 920167782
  %v1403 = vsel %vm1395, %v1386, %v1402
  %v1404 = vsel %vm1394, %v1401, %v1403
  %v1405 = vsel %vm1393, %v1383, %v1386
  %v1406 = vsel %vm1396, %v1392, 1326507024
  %v1407 = vsel %vm1395, %v1389, %v1406
  %v1408 = vsel %vm1394, %v1405, %v1407
  %v1409 = vshll.u32 %v1369, 8
  %v1410 = vmul.u32.u64.compose %v1409, %v1408
  %v1411 = vextract.low.u32 %v1410
  %v1412 = vextract.high.u32 %v1410
  %v1413 = vmul.u32.u64.compose %v1409, %v1404
  %v1414 = vextract.low.u32 %v1413
  %v1415 = vextract.high.u32 %v1413
  %v1416 = vmul.u32 %v1409, %v1400
  %v1417 = vadd.s32 %v1412, %v1414
  %vm1418 = vc.u32 %v1412, %v1414
  %v1419 = vadd.s32 %v1415, 1
  %v1420 = vsel %vm1418, %v1419, %v1415
  %v1421 = vadd.s32 %v1416, %v1420
  %v1422 = vadd.s32 %v1421, 536870912
  %v1423 = vshrl.u32 %v1422, 30
  %v1424 = vshll.u32 %v1423, 30
  %v1425 = vsub.s32 %v1421, %v1424
  %vm1426 = vcmp.lt.s32.totalorder %v1425, 0
  %v1427 = vsub.s32 0, %v1425
  %v1428 = vsel %vm1426, %v1427, %v1425
  %v1429 = vclz %v1428
  %v1430 = vsub.s32 %v1429, 2
  %vm1431 = vcmp.gt.s32.totalorder 0, %v1430
  %v1432 = vsel %vm1431, 0, %v1430
  %v1433 = vsub.s32 32, %v1432
  %v1434 = vshll.u32 %v1425, %v1432
  %v1435 = vshrl.u32 %v1417, %v1433
  %v1436 = vor.u32 %v1434, %v1435
  %v1437 = vsub.s32 4294967266, %v1432
  %v1438 = vadd.s32 %v1437, 127
  %v1439 = vshll.u32 %v1438, 23
  %v1440 = vor.u32 4788187, %v1439
  %v1441 = vand.u32 2147483647, %v1440
  %v1443 = vcvt.s32.f32 %v1436
  %v1444 = vmul.f32 %v1443, %v1441
  %v1445 = vxor.u32 %v1444, 2147483648
  %v1446 = vsel %vm1363, %v1445, %v1444
  %v1447 = vsub.s32 4, %v1423
  %v1448 = vsel %vm1363, %v1447, %v1423
  %v1449 = vsel %vm1362, %v1254, %v1446
  %v1450 = vsel %vm1362, 0, %v1448
  %v1451 = vcosq.f32.pop %v1449
  %v1452 = vsinq.f32.pop %v1449
  %vm1453 = vweird.f32 %v1254
  %v1454 = vand.u32 %v1450, 3
  %vm1455 = vcmp.lt.s32.totalorder %v1454, 2
  %vm1456 = vcmp.eq.s32.totalorder %v1454, 0
  %v1457 = vxor.u32 %v1452, 2147483648
  %v1458 = vsel %vm1456, %v1451, %v1457
  %vm1459 = vcmp.eq.s32.totalorder %v1454, 2
  %v1460 = vxor.u32 %v1451, 2147483648
  %v1461 = vsel %vm1459, %v1460, %v1452
  %v1462 = vsel %vm1455, %v1458, %v1461
  %v1463 = vsel %vm1453, nan, %v1462
  %v1464 = vand.u32 2147483647, %v1255
  %vm1465 = vcmp.le.f32.partialorder %v1464, 0.7853982
  %vm1466 = vcmp.lt.s32.totalorder %v1255, 0
  %v1467 = vand.u32 %v1255, 2139095040
  %v1468 = vshrl.u32 %v1467, 23
  %v1469 = vsub.s32 %v1468, 127
  %v1470 = vand.u32 2147483647, %v1255
  %v1471 = vand.u32 %v1470, 8388607
  %v1472 = vor.u32 %v1471, 8388608
  %v1473 = vsub.s32 0, %v1472
  %v1474 = vadd.s32 %v1469, 1
  %vm1475 = vcmp.gt.s32.totalorder %v1474, 0
  %v1476 = vsel %vm1475, %v1474, 0
  %v1477 = vshrl.u32 %v1476, 5
  %v1478 = vand.u32 %v1476, 31
  %v1479 = vsub.s32 32, %v1478
  %v1480 = vshrl.u32 683565275, %v1479
  %v1481 = vshll.u32 683565275, %v1478
  %v1482 = vshrl.u32 2475754826, %v1479
  %v1483 = vor.u32 %v1481, %v1482
  %v1484 = vshll.u32 2475754826, %v1478
  %v1485 = vshrl.u32 2131351028, %v1479
  %v1486 = vor.u32 %v1484, %v1485
  %v1487 = vshll.u32 2131351028, %v1478
  %v1488 = vshrl.u32 2102212464, %v1479
  %v1489 = vor.u32 %v1487, %v1488
  %v1490 = vshll.u32 2102212464, %v1478
  %v1491 = vshrl.u32 920167782, %v1479
  %v1492 = vor.u32 %v1490, %v1491
  %v1493 = vshll.u32 920167782, %v1478
  %v1494 = vshrl.u32 1326507024, %v1479
  %v1495 = vor.u32 %v1493, %v1494
  %vm1496 = vcmp.lt.s32.totalorder %v1477, 1
  %vm1497 = vcmp.lt.s32.totalorder %v1477, 2
  %vm1498 = vcmp.lt.s32.totalorder %v1477, 3
  %vm1499 = vcmp.lt.s32.totalorder %v1477, 4
  %v1500 = vsel %vm1496, %v1480, %v1483
  %v1501 = vsel %vm1499, %v1489, 2102212464
  %v1502 = vsel %vm1498, %v1486, %v1501
  %v1503 = vsel %vm1497, %v1500, %v1502
  %v1504 = vsel %vm1496, %v1483, %v1486
  %v1505 = vsel %vm1499, %v1492, 920167782
  %v1506 = vsel %vm1498, %v1489, %v1505
  %v1507 = vsel %vm1497, %v1504, %v1506
  %v1508 = vsel %vm1496, %v1486, %v1489
  %v1509 = vsel %vm1499, %v1495, 1326507024
  %v1510 = vsel %vm1498, %v1492, %v1509
  %v1511 = vsel %vm1497, %v1508, %v1510
  %v1512 = vshll.u32 %v1472, 8
  %v1513 = vmul.u32.u64.compose %v1512, %v1511
  %v1514 = vextract.low.u32 %v1513
  %v1515 = vextract.high.u32 %v1513
  %v1516 = vmul.u32.u64.compose %v1512, %v1507
  %v1517 = vextract.low.u32 %v1516
  %v1518 = vextract.high.u32 %v1516
  %v1519 = vmul.u32 %v1512, %v1503
  %v1520 = vadd.s32 %v1515, %v1517
  %vm1521 = vc.u32 %v1515, %v1517
  %v1522 = vadd.s32 %v1518, 1
  %v1523 = vsel %vm1521, %v1522, %v1518
  %v1524 = vadd.s32 %v1519, %v1523
  %v1525 = vadd.s32 %v1524, 536870912
  %v1526 = vshrl.u32 %v1525, 30
  %v1527 = vshll.u32 %v1526, 30
  %v1528 = vsub.s32 %v1524, %v1527
  %vm1529 = vcmp.lt.s32.totalorder %v1528, 0
  %v1530 = vsub.s32 0, %v1528
  %v1531 = vsel %vm1529, %v1530, %v1528
  %v1532 = vclz %v1531
  %v1533 = vsub.s32 %v1532, 2
  %vm1534 = vcmp.gt.s32.totalorder 0, %v1533
  %v1535 = vsel %vm1534, 0, %v1533
  %v1536 = vsub.s32 32, %v1535
  %v1537 = vshll.u32 %v1528, %v1535
  %v1538 = vshrl.u32 %v1520, %v1536
  %v1539 = vor.u32 %v1537, %v1538
  %v1540 = vsub.s32 4294967266, %v1535
  %v1541 = vadd.s32 %v1540, 127
  %v1542 = vshll.u32 %v1541, 23
  %v1543 = vor.u32 4788187, %v1542
  %v1544 = vand.u32 2147483647, %v1543
  %v1546 = vcvt.s32.f32 %v1539
  %v1547 = vmul.f32 %v1546, %v1544
  %v1548 = vxor.u32 %v1547, 2147483648
  %v1549 = vsel %vm1466, %v1548, %v1547
  %v1550 = vsub.s32 4, %v1526
  %v1551 = vsel %vm1466, %v1550, %v1526
  %v1552 = vsel %vm1465, %v1255, %v1549
  %v1553 = vsel %vm1465, 0, %v1551
  %v1554 = vcosq.f32.pop %v1552
  %v1555 = vsinq.f32.pop %v1552
  %vm1556 = vweird.f32 %v1255
  %v1557 = vand.u32 %v1553, 3
  %vm1558 = vcmp.lt.s32.totalorder %v1557, 2
  %vm1559 = vcmp.eq.s32.totalorder %v1557, 0
  %v1560 = vxor.u32 %v1555, 2147483648
  %v1561 = vsel %vm1559, %v1554, %v1560
  %vm1562 = vcmp.eq.s32.totalorder %v1557, 2
  %v1563 = vxor.u32 %v1554, 2147483648
  %v1564 = vsel %vm1562, %v1563, %v1555
  %v1565 = vsel %vm1558, %v1561, %v1564
  %v1566 = vsel %vm1556, nan, %v1565
  %v1567 = vand.u32 2147483647, %v1256
  %vm1568 = vcmp.le.f32.partialorder %v1567, 0.7853982
  %vm1569 = vcmp.lt.s32.totalorder %v1256, 0
  %v1570 = vand.u32 %v1256, 2139095040
  %v1571 = vshrl.u32 %v1570, 23
  %v1572 = vsub.s32 %v1571, 127
  %v1573 = vand.u32 2147483647, %v1256
  %v1574 = vand.u32 %v1573, 8388607
  %v1575 = vor.u32 %v1574, 8388608
  %v1576 = vsub.s32 0, %v1575
  %v1577 = vadd.s32 %v1572, 1
  %vm1578 = vcmp.gt.s32.totalorder %v1577, 0
  %v1579 = vsel %vm1578, %v1577, 0
  %v1580 = vshrl.u32 %v1579, 5
  %v1581 = vand.u32 %v1579, 31
  %v1582 = vsub.s32 32, %v1581
  %v1583 = vshrl.u32 683565275, %v1582
  %v1584 = vshll.u32 683565275, %v1581
  %v1585 = vshrl.u32 2475754826, %v1582
  %v1586 = vor.u32 %v1584, %v1585
  %v1587 = vshll.u32 2475754826, %v1581
  %v1588 = vshrl.u32 2131351028, %v1582
  %v1589 = vor.u32 %v1587, %v1588
  %v1590 = vshll.u32 2131351028, %v1581
  %v1591 = vshrl.u32 2102212464, %v1582
  %v1592 = vor.u32 %v1590, %v1591
  %v1593 = vshll.u32 2102212464, %v1581
  %v1594 = vshrl.u32 920167782, %v1582
  %v1595 = vor.u32 %v1593, %v1594
  %v1596 = vshll.u32 920167782, %v1581
  %v1597 = vshrl.u32 1326507024, %v1582
  %v1598 = vor.u32 %v1596, %v1597
  %vm1599 = vcmp.lt.s32.totalorder %v1580, 1
  %vm1600 = vcmp.lt.s32.totalorder %v1580, 2
  %vm1601 = vcmp.lt.s32.totalorder %v1580, 3
  %vm1602 = vcmp.lt.s32.totalorder %v1580, 4
  %v1603 = vsel %vm1599, %v1583, %v1586
  %v1604 = vsel %vm1602, %v1592, 2102212464
  %v1605 = vsel %vm1601, %v1589, %v1604
  %v1606 = vsel %vm1600, %v1603, %v1605
  %v1607 = vsel %vm1599, %v1586, %v1589
  %v1608 = vsel %vm1602, %v1595, 920167782
  %v1609 = vsel %vm1601, %v1592, %v1608
  %v1610 = vsel %vm1600, %v1607, %v1609
  %v1611 = vsel %vm1599, %v1589, %v1592
  %v1612 = vsel %vm1602, %v1598, 1326507024
  %v1613 = vsel %vm1601, %v1595, %v1612
  %v1614 = vsel %vm1600, %v1611, %v1613
  %v1615 = vshll.u32 %v1575, 8
  %v1616 = vmul.u32.u64.compose %v1615, %v1614
  %v1617 = vextract.low.u32 %v1616
  %v1618 = vextract.high.u32 %v1616
  %v1619 = vmul.u32.u64.compose %v1615, %v1610
  %v1620 = vextract.low.u32 %v1619
  %v1621 = vextract.high.u32 %v1619
  %v1622 = vmul.u32 %v1615, %v1606
  %v1623 = vadd.s32 %v1618, %v1620
  %vm1624 = vc.u32 %v1618, %v1620
  %v1625 = vadd.s32 %v1621, 1
  %v1626 = vsel %vm1624, %v1625, %v1621
  %v1627 = vadd.s32 %v1622, %v1626
  %v1628 = vadd.s32 %v1627, 536870912
  %v1629 = vshrl.u32 %v1628, 30
  %v1630 = vshll.u32 %v1629, 30
  %v1631 = vsub.s32 %v1627, %v1630
  %vm1632 = vcmp.lt.s32.totalorder %v1631, 0
  %v1633 = vsub.s32 0, %v1631
  %v1634 = vsel %vm1632, %v1633, %v1631
  %v1635 = vclz %v1634
  %v1636 = vsub.s32 %v1635, 2
  %vm1637 = vcmp.gt.s32.totalorder 0, %v1636
  %v1638 = vsel %vm1637, 0, %v1636
  %v1639 = vsub.s32 32, %v1638
  %v1640 = vshll.u32 %v1631, %v1638
  %v1641 = vshrl.u32 %v1623, %v1639
  %v1642 = vor.u32 %v1640, %v1641
  %v1643 = vsub.s32 4294967266, %v1638
  %v1644 = vadd.s32 %v1643, 127
  %v1645 = vshll.u32 %v1644, 23
  %v1646 = vor.u32 4788187, %v1645
  %v1647 = vand.u32 2147483647, %v1646
  %v1649 = vcvt.s32.f32 %v1642
  %v1650 = vmul.f32 %v1649, %v1647
  %v1651 = vxor.u32 %v1650, 2147483648
  %v1652 = vsel %vm1569, %v1651, %v1650
  %v1653 = vsub.s32 4, %v1629
  %v1654 = vsel %vm1569, %v1653, %v1629
  %v1655 = vsel %vm1568, %v1256, %v1652
  %v1656 = vsel %vm1568, 0, %v1654
  %v1657 = vcosq.f32.pop %v1655
  %v1658 = vsinq.f32.pop %v1655
  %vm1659 = vweird.f32 %v1256
  %v1660 = vand.u32 %v1656, 3
  %vm1661 = vcmp.lt.s32.totalorder %v1660, 2
  %vm1662 = vcmp.eq.s32.totalorder %v1660, 0
  %v1663 = vxor.u32 %v1658, 2147483648
  %v1664 = vsel %vm1662, %v1657, %v1663
  %vm1665 = vcmp.eq.s32.totalorder %v1660, 2
  %v1666 = vxor.u32 %v1657, 2147483648
  %v1667 = vsel %vm1665, %v1666, %v1658
  %v1668 = vsel %vm1661, %v1664, %v1667
  %v1669 = vsel %vm1659, nan, %v1668
  %v1670 = vand.u32 2147483647, %v1257
  %vm1671 = vcmp.le.f32.partialorder %v1670, 0.7853982
  %vm1672 = vcmp.lt.s32.totalorder %v1257, 0
  %v1673 = vand.u32 %v1257, 2139095040
  %v1674 = vshrl.u32 %v1673, 23
  %v1675 = vsub.s32 %v1674, 127
  %v1676 = vand.u32 2147483647, %v1257
  %v1677 = vand.u32 %v1676, 8388607
  %v1678 = vor.u32 %v1677, 8388608
  %v1679 = vsub.s32 0, %v1678
  %v1680 = vadd.s32 %v1675, 1
  %vm1681 = vcmp.gt.s32.totalorder %v1680, 0
  %v1682 = vsel %vm1681, %v1680, 0
  %v1683 = vshrl.u32 %v1682, 5
  %v1684 = vand.u32 %v1682, 31
  %v1685 = vsub.s32 32, %v1684
  %v1686 = vshrl.u32 683565275, %v1685
  %v1687 = vshll.u32 683565275, %v1684
  %v1688 = vshrl.u32 2475754826, %v1685
  %v1689 = vor.u32 %v1687, %v1688
  %v1690 = vshll.u32 2475754826, %v1684
  %v1691 = vshrl.u32 2131351028, %v1685
  %v1692 = vor.u32 %v1690, %v1691
  %v1693 = vshll.u32 2131351028, %v1684
  %v1694 = vshrl.u32 2102212464, %v1685
  %v1695 = vor.u32 %v1693, %v1694
  %v1696 = vshll.u32 2102212464, %v1684
  %v1697 = vshrl.u32 920167782, %v1685
  %v1698 = vor.u32 %v1696, %v1697
  %v1699 = vshll.u32 920167782, %v1684
  %v1700 = vshrl.u32 1326507024, %v1685
  %v1701 = vor.u32 %v1699, %v1700
  %vm1702 = vcmp.lt.s32.totalorder %v1683, 1
  %vm1703 = vcmp.lt.s32.totalorder %v1683, 2
  %vm1704 = vcmp.lt.s32.totalorder %v1683, 3
  %vm1705 = vcmp.lt.s32.totalorder %v1683, 4
  %v1706 = vsel %vm1702, %v1686, %v1689
  %v1707 = vsel %vm1705, %v1695, 2102212464
  %v1708 = vsel %vm1704, %v1692, %v1707
  %v1709 = vsel %vm1703, %v1706, %v1708
  %v1710 = vsel %vm1702, %v1689, %v1692
  %v1711 = vsel %vm1705, %v1698, 920167782
  %v1712 = vsel %vm1704, %v1695, %v1711
  %v1713 = vsel %vm1703, %v1710, %v1712
  %v1714 = vsel %vm1702, %v1692, %v1695
  %v1715 = vsel %vm1705, %v1701, 1326507024
  %v1716 = vsel %vm1704, %v1698, %v1715
  %v1717 = vsel %vm1703, %v1714, %v1716
  %v1718 = vshll.u32 %v1678, 8
  %v1719 = vmul.u32.u64.compose %v1718, %v1717
  %v1720 = vextract.low.u32 %v1719
  %v1721 = vextract.high.u32 %v1719
  %v1722 = vmul.u32.u64.compose %v1718, %v1713
  %v1723 = vextract.low.u32 %v1722
  %v1724 = vextract.high.u32 %v1722
  %v1725 = vmul.u32 %v1718, %v1709
  %v1726 = vadd.s32 %v1721, %v1723
  %vm1727 = vc.u32 %v1721, %v1723
  %v1728 = vadd.s32 %v1724, 1
  %v1729 = vsel %vm1727, %v1728, %v1724
  %v1730 = vadd.s32 %v1725, %v1729
  %v1731 = vadd.s32 %v1730, 536870912
  %v1732 = vshrl.u32 %v1731, 30
  %v1733 = vshll.u32 %v1732, 30
  %v1734 = vsub.s32 %v1730, %v1733
  %vm1735 = vcmp.lt.s32.totalorder %v1734, 0
  %v1736 = vsub.s32 0, %v1734
  %v1737 = vsel %vm1735, %v1736, %v1734
  %v1738 = vclz %v1737
  %v1739 = vsub.s32 %v1738, 2
  %vm1740 = vcmp.gt.s32.totalorder 0, %v1739
  %v1741 = vsel %vm1740, 0, %v1739
  %v1742 = vsub.s32 32, %v1741
  %v1743 = vshll.u32 %v1734, %v1741
  %v1744 = vshrl.u32 %v1726, %v1742
  %v1745 = vor.u32 %v1743, %v1744
  %v1746 = vsub.s32 4294967266, %v1741
  %v1747 = vadd.s32 %v1746, 127
  %v1748 = vshll.u32 %v1747, 23
  %v1749 = vor.u32 4788187, %v1748
  %v1750 = vand.u32 2147483647, %v1749
  %v1752 = vcvt.s32.f32 %v1745
  %v1753 = vmul.f32 %v1752, %v1750
  %v1754 = vxor.u32 %v1753, 2147483648
  %v1755 = vsel %vm1672, %v1754, %v1753
  %v1756 = vsub.s32 4, %v1732
  %v1757 = vsel %vm1672, %v1756, %v1732
  %v1758 = vsel %vm1671, %v1257, %v1755
  %v1759 = vsel %vm1671, 0, %v1757
  %v1760 = vcosq.f32.pop %v1758
  %v1761 = vsinq.f32.pop %v1758
  %vm1762 = vweird.f32 %v1257
  %v1763 = vand.u32 %v1759, 3
  %vm1764 = vcmp.lt.s32.totalorder %v1763, 2
  %vm1765 = vcmp.eq.s32.totalorder %v1763, 0
  %v1766 = vxor.u32 %v1761, 2147483648
  %v1767 = vsel %vm1765, %v1760, %v1766
  %vm1768 = vcmp.eq.s32.totalorder %v1763, 2
  %v1769 = vxor.u32 %v1760, 2147483648
  %v1770 = vsel %vm1768, %v1769, %v1761
  %v1771 = vsel %vm1764, %v1767, %v1770
  %v1772 = vsel %vm1762, nan, %v1771
  %v1773 = vmul.f32 %v1239, %v1360
  %v1774 = vmul.f32 %v1241, %v1463
  %v1775 = vmul.f32 %v1243, %v1566
  %v1776 = vmul.f32 %v1245, %v1669
  %v1777 = vmul.f32 %v1247, %v1772
  %v1778 = vmul.f32 %v33, 6.2831855
  %v1779 = vmul.f32 %v34, 6.2831855
  %v1780 = vmul.f32 %v35, 6.2831855
  %v1781 = vmul.f32 %v36, 6.2831855
  %v1782 = vmul.f32 %v37, 6.2831855
  %v1783 = vmul.f32 %v1778, %v33
  %v1784 = vmul.f32 %v1779, %v34
  %v1785 = vmul.f32 %v1780, %v35
  %v1786 = vmul.f32 %v1781, %v36
  %v1787 = vmul.f32 %v1782, %v37
  %v1788 = vrcp.pop %v1783
  %v1789 = vmul.f32 %v1773, %v1788
  %v1790 = vrcp.pop %v1784
  %v1791 = vmul.f32 %v1774, %v1790
  %v1792 = vrcp.pop %v1785
  %v1793 = vmul.f32 %v1775, %v1792
  %v1794 = vrcp.pop %v1786
  %v1795 = vmul.f32 %v1776, %v1794
  %v1796 = vrcp.pop %v1787
  %v1797 = vmul.f32 %v1777, %v1796
  %1798 = vst [vmem:[%s6] sm:$0xff] %v1789
  %1799 = vst [vmem:[%s6 + $0x8] sm:$0xff] %v1791
  %1800 = vst [vmem:[%s6 + $0x10] sm:$0xff] %v1793
  %1801 = vst [vmem:[%s6 + $0x18] sm:$0xff] %v1795
  %1802 = vst [vmem:[%s6 + $0x20] sm:$0xf] %v1797
  // Predicated region
  $region26: #{gabor_conv2d_forward.2} parent=0 // pred_check
    _
  $region27: #{gabor_conv2d_forward.2} parent=0 // pred_check_branch
    %1804 = sbr.rel (0) target = $region29
  $region28: #{gabor_conv2d_forward.2} parent=0 // pred_region
    _
  $region29: #{gabor_conv2d_forward.2} parent=0 // pred_fallthru
    _
  // Predicated region
  $region30: #{gabor_conv2d_forward.2} parent=0 // pred_check
    _
  $region31: #{gabor_conv2d_forward.2} parent=0 // pred_check_branch
    %1806 = sbr.rel (0) target = $region33
  $region32: #{gabor_conv2d_forward.2} parent=0 // pred_region
    _
  $region33: #{gabor_conv2d_forward.2} parent=0 // pred_fallthru
    _

// kernel: gabor_conv2d_forward.3
$region0: #{gabor_conv2d_forward.3}
  #allocation0 [shape = 'u32[]', space=smem, size = 0x4, offset = 0x4, fixed_abs, tag = 'smem constant byte address 0x4 - core index']
  #allocation1 [shape = 'u32[144,128]{1,0:T(1,128)}', space=vmem, size = 0x12000, scoped, tag = 'internal scratch']
  %s0 = inlined_call_operand.vmem [shape: f32[512,36], index: 0, kind: input, shape index: {}]
  %s1 = inlined_call_operand.vmem [shape: f32[36,128], index: 1, kind: input, shape index: {}]
  %s2 = inlined_call_operand.vmem [shape: f32[512,128], index: 2, kind: output, shape index: {}]
  %s3 = sld [smem:[#allocation0]]
  $region41: #{gabor_conv2d_forward.3} parent=0
    _
  %s5 = ssub.s32 1, %s3
  %s6 = scalar_select 0, %s5, %s3
  loop: start=0, step=1, limit=4
  $region2: #{gabor_conv2d_forward.3} parent=0 // loop_pre_header
    _
  $region3: #{gabor_conv2d_forward.3} parent=0 // loop_header
    %s8 = sphi 0, %s12
    %p9 = scmp.ge.s32.totalorder %s8, 4
    %s18 = sphi 0, %s20
    %s21 = sphi 0, %s18
    %s22 = sphi 0, %s21
    %s38 = sphi 0, %s22
    %s42 = sphi 0, %s42
    %s44 = sphi 0, %s42
    %s45 = sphi 0, %s44
    %s59 = sphi 0, %s45
    %s65 = sphi 0, %s67
    %s68 = sphi 0, %s65
    %s69 = sphi 0, %s68
    %s85 = sphi 0, %s69
  $region4: #{gabor_conv2d_forward.3} parent=0 // loop_header_branch
    %11 = sbr.rel (%p9) target = $region8
  $region5: #{gabor_conv2d_forward.3} parent=0 // loop_body
    %s13 = ssub.s32 %s8, 1
    %s14 = ssub.s32 %s8, 2
    %s15 = sadd.s32 %s8, 1
    %s16 = ssub.s32 %s8, %s15
    %p17 = scmp.eq.s32.totalorder %s16, 0
    %s19 = sadd.s32 %s18, 1
    %s20 = scalar_select %p17, %s18, %s19
    %p23 = pneg %p17
    %p24 = scmp.eq.s32.totalorder %s8, 1
    %p25 = por %p23, %p24
    %p26 = scmp.ne.s32.totalorder %s18, %s21
    %p27 = scmp.eq.s32.totalorder %s8, 0
    %p28 = por %p26, %p27
    %p29 = scmp.ne.s32.totalorder %s18, %s21
    %p30 = scmp.eq.s32.totalorder %s13, 1
    %p31 = por %p29, %p30
    %p32 = scmp.ne.s32.totalorder %s21, %s22
    %p33 = scmp.eq.s32.totalorder %s13, 0
    %p34 = por %p32, %p33
    %p35 = scmp.ne.s32.totalorder %s21, %s22
    %p36 = scmp.eq.s32.totalorder %s14, 1
    %p37 = por %p35, %p36
    %p39 = scmp.ne.s32.totalorder %s22, %s38
    %p40 = scmp.eq.s32.totalorder %s14, 0
    %p41 = por %p39, %p40
    %s43 = sadd.s32 %s42, 1
    %p46 = scmp.eq.s32.totalorder %s8, 1
    %p47 = scmp.ne.s32.totalorder %s42, %s44
    %p48 = scmp.eq.s32.totalorder %s8, 0
    %p49 = por %p47, %p48
    %p50 = scmp.ne.s32.totalorder %s42, %s44
    %p51 = scmp.eq.s32.totalorder %s13, 1
    %p52 = por %p50, %p51
    %p53 = scmp.ne.s32.totalorder %s44, %s45
    %p54 = scmp.eq.s32.totalorder %s13, 0
    %p55 = por %p53, %p54
    %p56 = scmp.ne.s32.totalorder %s44, %s45
    %p57 = scmp.eq.s32.totalorder %s14, 1
    %p58 = por %p56, %p57
    %p60 = scmp.ne.s32.totalorder %s45, %s59
    %p61 = scmp.eq.s32.totalorder %s14, 0
    %p62 = por %p60, %p61
    %s63 = ssub.s32 %s8, %s15
    %p64 = scmp.eq.s32.totalorder %s63, 0
    %s66 = sadd.s32 %s65, 1
    %s67 = scalar_select %p64, %s65, %s66
    %p70 = pneg %p64
    %p71 = scmp.eq.s32.totalorder %s8, 1
    %p72 = por %p70, %p71
    %p73 = scmp.ne.s32.totalorder %s65, %s68
    %p74 = scmp.eq.s32.totalorder %s8, 0
    %p75 = por %p73, %p74
    %p76 = scmp.ne.s32.totalorder %s65, %s68
    %p77 = scmp.eq.s32.totalorder %s13, 1
    %p78 = por %p76, %p77
    %p79 = scmp.ne.s32.totalorder %s68, %s69
    %p80 = scmp.eq.s32.totalorder %s13, 0
    %p81 = por %p79, %p80
    %p82 = scmp.ne.s32.totalorder %s68, %s69
    %p83 = scmp.eq.s32.totalorder %s14, 1
    %p84 = por %p82, %p83
    %p86 = scmp.ne.s32.totalorder %s69, %s85
    %p87 = scmp.eq.s32.totalorder %s14, 0
    %p88 = por %p86, %p87
    %p89 = scmp.le.s32.totalorder 1, %s8
    %p90 = scmp.lt.s32.totalorder %s8, 3
    %p91 = pnand %p89, %p90
    %p92 = pneg %p91
    // Predicated region
    $region9: #{gabor_conv2d_forward.3} parent=5 // pred_check
      _
    $region10: #{gabor_conv2d_forward.3} parent=5 // pred_check_branch
      %94 = sbr.rel (%p91) target = $region12
    $region11: #{gabor_conv2d_forward.3} parent=5 // pred_region
      %s95 = ssub.s32 %s8, 1
      // Predicated region
      $region13: #{gabor_conv2d_forward.3} parent=11 // pred_check
        %p96 = pneg %p55
      $region14: #{gabor_conv2d_forward.3} parent=11 // pred_check_branch
        %98 = sbr.rel (%p96) target = $region16
      $region15: #{gabor_conv2d_forward.3} parent=11 // pred_region
        _
      $region16: #{gabor_conv2d_forward.3} parent=11 // pred_fallthru
        _
    $region12: #{gabor_conv2d_forward.3} parent=5 // pred_fallthru
      _
    %p99 = scmp.lt.s32.totalorder %s8, 2
    // Predicated region
    $region17: #{gabor_conv2d_forward.3} parent=5 // pred_check
      %p100 = pneg %p99
    $region18: #{gabor_conv2d_forward.3} parent=5 // pred_check_branch
      %102 = sbr.rel (%p100) target = $region20
    $region19: #{gabor_conv2d_forward.3} parent=5 // pred_region
      // Predicated region
      $region21: #{gabor_conv2d_forward.3} parent=19 // pred_check
        %p103 = pneg %p28
      $region22: #{gabor_conv2d_forward.3} parent=19 // pred_check_branch
        %105 = sbr.rel (%p103) target = $region24
      $region23: #{gabor_conv2d_forward.3} parent=19 // pred_region
        %s106 = smul.u32 32, %s8
        %p107 = scmp.lt.s32.totalorder %s106, 63
        %s108 = scalar_select %p107, %s106, 63
        %s109 = smul.addr %s108, 8
        %s110 = scalar_lea.vmem %s0, %s109
        %s111 = smul.u32 32, %s8
      $region24: #{gabor_conv2d_forward.3} parent=19 // pred_fallthru
        _
    $region20: #{gabor_conv2d_forward.3} parent=5 // pred_fallthru
      _
    %p112 = scmp.le.s32.totalorder 1, %s8
    %p113 = scmp.lt.s32.totalorder %s8, 3
    %p114 = pnand %p112, %p113
    %p115 = pneg %p114
    // Predicated region
    $region25: #{gabor_conv2d_forward.3} parent=5 // pred_check
      _
    $region26: #{gabor_conv2d_forward.3} parent=5 // pred_check_branch
      %117 = sbr.rel (%p114) target = $region28
    $region27: #{gabor_conv2d_forward.3} parent=5 // pred_region
      %s118 = ssub.s32 %s8, 1
      %s119 = smul.u32 32, %s13
      %p120 = scmp.lt.s32.totalorder %s119, 63
      %s121 = scalar_select %p120, %s119, 63
      %s122 = smul.addr %s121, 8
      %s123 = scalar_lea.vmem %s0, %s122
      %p124 = pneg %p34
      %p125 = pneg %p31
      %p126 = pneg %p55
      %p127 = pneg %p52
      %p128 = pneg %p81
      %p129 = pneg %p78
      %s130 = smul.u32 32, %s13
      %p131 = scmp.lt.s32.totalorder %s130, 63
      %s132 = scalar_select %p131, %s130, 63
      %s133 = smul.addr %s132, 8
      %s134 = scalar_lea.vmem %s2, %s133
      %s135 = smul.u32 32, %s13
      %p136 = scmp.lt.s32.totalorder %s135, 63
      %s137 = scalar_select %p136, %s135, 63
      %s138 = smul.addr %s137, 8
      %s139 = scalar_lea.vmem %s0, %s138
      %s140 = smul.u32 32, %s13
      %s141 = smul.u32 32, %s13
      %p142 = scmp.lt.s32.totalorder %s141, 63
      %s143 = scalar_select %p142, %s141, 63
      %s144 = smul.addr %s143, 8
      %s145 = scalar_lea.vmem %s2, %s144
      %s146 = smul.u32 32, %s13
      %v147 = vld [vmem:[%s139] sm:$0xff]
      %v148 = vld [vmem:[%s139 + $0x8] sm:$0xff]
      %v149 = vld [vmem:[%s139 + $0x10] sm:$0xff]
      %v150 = vld [vmem:[%s139 + $0x18] sm:$0xff]
      %v151 = vld [vmem:[%s139 + $0x20] sm:$0xff]
      %v152 = vld [vmem:[%s139 + $0x28] sm:$0xff]
      %v153 = vld [vmem:[%s139 + $0x30] sm:$0xff]
      %v154 = vld [vmem:[%s139 + $0x38] sm:$0xff]
      %v155 = vld [vmem:[%s139 + $0x40] sm:$0xff]
      %v156 = vld [vmem:[%s139 + $0x48] sm:$0xff]
      %v157 = vld [vmem:[%s139 + $0x50] sm:$0xff]
      %v158 = vld [vmem:[%s139 + $0x58] sm:$0xff]
      %v159 = vld [vmem:[%s139 + $0x60] sm:$0xff]
      %v160 = vld [vmem:[%s139 + $0x68] sm:$0xff]
      %v161 = vld [vmem:[%s139 + $0x70] sm:$0xff]
      %v162 = vld [vmem:[%s139 + $0x78] sm:$0xff]
      %v163 = vld [vmem:[%s139 + $0x80] sm:$0xff]
      %v164 = vld [vmem:[%s139 + $0x88] sm:$0xff]
      %v165 = vld [vmem:[%s139 + $0x90] sm:$0xff]
      %v166 = vld [vmem:[%s139 + $0x98] sm:$0xff]
      %v167 = vld [vmem:[%s139 + $0xa0] sm:$0xff]
      %v168 = vld [vmem:[%s139 + $0xa8] sm:$0xff]
      %v169 = vld [vmem:[%s139 + $0xb0] sm:$0xff]
      %v170 = vld [vmem:[%s139 + $0xb8] sm:$0xff]
      %v171 = vld [vmem:[%s139 + $0xc0] sm:$0xff]
      %v172 = vld [vmem:[%s139 + $0xc8] sm:$0xff]
      %v173 = vld [vmem:[%s139 + $0xd0] sm:$0xff]
      %v174 = vld [vmem:[%s139 + $0xd8] sm:$0xff]
      %v175 = vld [vmem:[%s139 + $0xe0] sm:$0xff]
      %v176 = vld [vmem:[%s139 + $0xe8] sm:$0xff]
      %v177 = vld [vmem:[%s139 + $0xf0] sm:$0xff]
      %v178 = vld [vmem:[%s139 + $0xf8] sm:$0xff]
      %v179 = vld [vmem:[%s1] sm:$0xff]
      %v180 = vld [vmem:[%s1 + $0x8] sm:$0xff]
      %v181 = vld [vmem:[%s1 + $0x10] sm:$0xff]
      %v182 = vld [vmem:[%s1 + $0x18] sm:$0xff]
      %v183 = vld [vmem:[%s1 + $0x20] sm:$0xf]
      %vm184 = vcmask 293888
      %v186 = vsel %vm184, %v147, 0
      %v189 = vsel %vm184, %v148, 0
      %v192 = vsel %vm184, %v149, 0
      %v195 = vsel %vm184, %v150, 0
      %v198 = vsel %vm184, %v151, 0
      %v201 = vsel %vm184, %v152, 0
      %v204 = vsel %vm184, %v153, 0
      %v207 = vsel %vm184, %v154, 0
      %v210 = vsel %vm184, %v155, 0
      %v213 = vsel %vm184, %v156, 0
      %v216 = vsel %vm184, %v157, 0
      %v219 = vsel %vm184, %v158, 0
      %v222 = vsel %vm184, %v159, 0
      %v225 = vsel %vm184, %v160, 0
      %v228 = vsel %vm184, %v161, 0
      %v231 = vsel %vm184, %v162, 0
      %v234 = vsel %vm184, %v163, 0
      %v237 = vsel %vm184, %v164, 0
      %v240 = vsel %vm184, %v165, 0
      %v243 = vsel %vm184, %v166, 0
      %v246 = vsel %vm184, %v167, 0
      %v249 = vsel %vm184, %v168, 0
      %v252 = vsel %vm184, %v169, 0
      %v255 = vsel %vm184, %v170, 0
      %v258 = vsel %vm184, %v171, 0
      %v261 = vsel %vm184, %v172, 0
      %v264 = vsel %vm184, %v173, 0
      %v267 = vsel %vm184, %v174, 0
      %v270 = vsel %vm184, %v175, 0
      %v273 = vsel %vm184, %v176, 0
      %v276 = vsel %vm184, %v177, 0
      %v279 = vsel %vm184, %v178, 0
      %vm281 = vcmask 1043456
      %v283 = vsel %vm281, %v183, 0
      %285 = vmatprep.subr.mxu0 0.0
      %286 = vmatpush1.msra.mxu0 0.0
      %287 = vmatprep.subr.mxu0 0.0
      %288 = vmatpush1.msra.mxu0 0.0
      %289 = vmatprep.subr.mxu0 0.0
      %290 = vmatpush1.msra.mxu0 0.0
      %291 = vmatprep.subr.mxu0 0.0
      %292 = vmatpush1.msra.mxu0 0.0
      %293 = vmatprep.subr.mxu0 0.0
      %294 = vmatpush1.msra.mxu0 0.0
      %295 = vmatprep.subr.mxu0 0.0
      %296 = vmatpush1.msra.mxu0 0.0
      %297 = vmatprep.subr.mxu0 0.0
      %298 = vmatpush1.msra.mxu0 0.0
      %299 = vmatprep.subr.mxu0 0.0
      %300 = vmatpush1.msra.mxu0 0.0
      %301 = vmatprep.subr.mxu0 0.0
      %302 = vmatpush1.msra.mxu0 0.0
      %303 = vmatprep.subr.mxu0 0.0
      %304 = vmatpush1.msra.mxu0 0.0
      %305 = vmatprep.subr.mxu0 0.0
      %306 = vmatpush1.msra.mxu0 0.0
      %307 = vmatprep.subr.mxu0 0.0
      %308 = vmatpush1.msra.mxu0 %v283
      %309 = vmatprep.subr.mxu0 0.0
      %310 = vmatpush1.msra.mxu0 %v182
      %311 = vmatprep.subr.mxu0 0.0
      %312 = vmatpush1.msra.mxu0 %v181
      %313 = vmatprep.subr.mxu0 0.0
      %314 = vmatpush1.msra.mxu0 %v180
      %315 = vmatprep.subr.mxu0 0.0
      %316 = vmatpush1.msra.mxu0 %v179
      %317 = vmatprep.subr.mxu0 0.0
      %318 = vmatpush2.msra.mxu0 0.0
      %319 = vmatprep.subr.mxu0 0.0
      %320 = vmatpush2.msra.mxu0 0.0
      %321 = vmatprep.subr.mxu0 0.0
      %322 = vmatpush2.msra.mxu0 0.0
      %323 = vmatprep.subr.mxu0 0.0
      %324 = vmatpush2.msra.mxu0 0.0
      %325 = vmatprep.subr.mxu0 0.0
      %326 = vmatpush2.msra.mxu0 0.0
      %327 = vmatprep.subr.mxu0 0.0
      %328 = vmatpush2.msra.mxu0 0.0
      %329 = vmatprep.subr.mxu0 0.0
      %330 = vmatpush2.msra.mxu0 0.0
      %331 = vmatprep.subr.mxu0 0.0
      %332 = vmatpush2.msra.mxu0 0.0
      %333 = vmatprep.subr.mxu0 0.0
      %334 = vmatpush2.msra.mxu0 0.0
      %335 = vmatprep.subr.mxu0 0.0
      %336 = vmatpush2.msra.mxu0 0.0
      %337 = vmatprep.subr.mxu0 0.0
      %338 = vmatpush2.msra.mxu0 0.0
      %339 = vmatprep.subr.mxu0 0.0
      %340 = vmatpush2.msra.mxu0 0.0
      %341 = vmatprep.subr.mxu0 0.0
      %342 = vmatpush2.msra.mxu0 0.0
      %343 = vmatprep.subr.mxu0 0.0
      %344 = vmatpush2.msra.mxu0 0.0
      %345 = vmatprep.subr.mxu0 0.0
      %346 = vmatpush2.msra.mxu0 0.0
      %347 = vmatprep.subr.mxu0 0.0
      %348 = vmatpush2.msra.mxu0 0.0
      %349 = vmatprep.mubr.f32.mxu0 0.0
      %350 = vmatmul.mubr.f32.gmra.mxu0 %v186
      %v351 = vpop.f32.mrf.mxu0
      %v352 = vadd.f32 0.0, %v351
      %v353 = vpop.f32.mrf.mxu0
      %354 = vmatprep.mubr.f32.mxu0 0.0
      %355 = vmatmul.mubr.f32.gmra.mxu0 %v189
      %v356 = vpop.f32.mrf.mxu0
      %v357 = vadd.f32 0.0, %v356
      %v358 = vpop.f32.mrf.mxu0
      %359 = vmatprep.mubr.f32.mxu0 0.0
      %360 = vmatmul.mubr.f32.gmra.mxu0 %v192
      %v361 = vpop.f32.mrf.mxu0
      %v362 = vadd.f32 0.0, %v361
      %v363 = vpop.f32.mrf.mxu0
      %364 = vmatprep.mubr.f32.mxu0 0.0
      %365 = vmatmul.mubr.f32.gmra.mxu0 %v195
      %v366 = vpop.f32.mrf.mxu0
      %v367 = vadd.f32 0.0, %v366
      %v368 = vpop.f32.mrf.mxu0
      %369 = vmatprep.mubr.f32.mxu0 0.0
      %370 = vmatmul.mubr.f32.gmra.mxu0 %v198
      %v371 = vpop.f32.mrf.mxu0
      %v372 = vadd.f32 0.0, %v371
      %v373 = vpop.f32.mrf.mxu0
      %374 = vmatprep.mubr.f32.mxu0 0.0
      %375 = vmatmul.mubr.f32.gmra.mxu0 %v201
      %v376 = vpop.f32.mrf.mxu0
      %v377 = vadd.f32 0.0, %v376
      %v378 = vpop.f32.mrf.mxu0
      %379 = vmatprep.mubr.f32.mxu0 0.0
      %380 = vmatmul.mubr.f32.gmra.mxu0 %v204
      %v381 = vpop.f32.mrf.mxu0
      %v382 = vadd.f32 0.0, %v381
      %v383 = vpop.f32.mrf.mxu0
      %384 = vmatprep.mubr.f32.mxu0 0.0
      %385 = vmatmul.mubr.f32.gmra.mxu0 %v207
      %v386 = vpop.f32.mrf.mxu0
      %v387 = vadd.f32 0.0, %v386
      %v388 = vpop.f32.mrf.mxu0
      %389 = vmatprep.mubr.f32.mxu0 0.0
      %390 = vmatmul.mubr.f32.gmra.mxu0 %v210
      %v391 = vpop.f32.mrf.mxu0
      %v392 = vadd.f32 0.0, %v391
      %v393 = vpop.f32.mrf.mxu0
      %394 = vmatprep.mubr.f32.mxu0 0.0
      %395 = vmatmul.mubr.f32.gmra.mxu0 %v213
      %v396 = vpop.f32.mrf.mxu0
      %v397 = vadd.f32 0.0, %v396
      %v398 = vpop.f32.mrf.mxu0
      %399 = vmatprep.mubr.f32.mxu0 0.0
      %400 = vmatmul.mubr.f32.gmra.mxu0 %v216
      %v401 = vpop.f32.mrf.mxu0
      %v402 = vadd.f32 0.0, %v401
      %v403 = vpop.f32.mrf.mxu0
      %404 = vmatprep.mubr.f32.mxu0 0.0
      %405 = vmatmul.mubr.f32.gmra.mxu0 %v219
      %v406 = vpop.f32.mrf.mxu0
      %v407 = vadd.f32 0.0, %v406
      %v408 = vpop.f32.mrf.mxu0
      %409 = vmatprep.mubr.f32.mxu0 0.0
      %410 = vmatmul.mubr.f32.gmra.mxu0 %v222
      %v411 = vpop.f32.mrf.mxu0
      %v412 = vadd.f32 0.0, %v411
      %v413 = vpop.f32.mrf.mxu0
      %414 = vmatprep.mubr.f32.mxu0 0.0
      %415 = vmatmul.mubr.f32.gmra.mxu0 %v225
      %v416 = vpop.f32.mrf.mxu0
      %v417 = vadd.f32 0.0, %v416
      %v418 = vpop.f32.mrf.mxu0
      %419 = vmatprep.mubr.f32.mxu0 0.0
      %420 = vmatmul.mubr.f32.gmra.mxu0 %v228
      %v421 = vpop.f32.mrf.mxu0
      %v422 = vadd.f32 0.0, %v421
      %v423 = vpop.f32.mrf.mxu0
      %424 = vmatprep.mubr.f32.mxu0 0.0
      %425 = vmatmul.mubr.f32.gmra.mxu0 %v231
      %v426 = vpop.f32.mrf.mxu0
      %v427 = vadd.f32 0.0, %v426
      %v428 = vpop.f32.mrf.mxu0
      %429 = vmatprep.mubr.f32.mxu0 0.0
      %430 = vmatmul.mubr.f32.gmra.mxu0 %v234
      %v431 = vpop.f32.mrf.mxu0
      %v432 = vadd.f32 0.0, %v431
      %v433 = vpop.f32.mrf.mxu0
      %434 = vmatprep.mubr.f32.mxu0 0.0
      %435 = vmatmul.mubr.f32.gmra.mxu0 %v237
      %v436 = vpop.f32.mrf.mxu0
      %v437 = vadd.f32 0.0, %v436
      %v438 = vpop.f32.mrf.mxu0
      %439 = vmatprep.mubr.f32.mxu0 0.0
      %440 = vmatmul.mubr.f32.gmra.mxu0 %v240
      %v441 = vpop.f32.mrf.mxu0
      %v442 = vadd.f32 0.0, %v441
      %v443 = vpop.f32.mrf.mxu0
      %444 = vmatprep.mubr.f32.mxu0 0.0
      %445 = vmatmul.mubr.f32.gmra.mxu0 %v243
      %v446 = vpop.f32.mrf.mxu0
      %v447 = vadd.f32 0.0, %v446
      %v448 = vpop.f32.mrf.mxu0
      %449 = vmatprep.mubr.f32.mxu0 0.0
      %450 = vmatmul.mubr.f32.gmra.mxu0 %v246
      %v451 = vpop.f32.mrf.mxu0
      %v452 = vadd.f32 0.0, %v451
      %v453 = vpop.f32.mrf.mxu0
      %454 = vmatprep.mubr.f32.mxu0 0.0
      %455 = vmatmul.mubr.f32.gmra.mxu0 %v249
      %v456 = vpop.f32.mrf.mxu0
      %v457 = vadd.f32 0.0, %v456
      %v458 = vpop.f32.mrf.mxu0
      %459 = vmatprep.mubr.f32.mxu0 0.0
      %460 = vmatmul.mubr.f32.gmra.mxu0 %v252
      %v461 = vpop.f32.mrf.mxu0
      %v462 = vadd.f32 0.0, %v461
      %v463 = vpop.f32.mrf.mxu0
      %464 = vmatprep.mubr.f32.mxu0 0.0
      %465 = vmatmul.mubr.f32.gmra.mxu0 %v255
      %v466 = vpop.f32.mrf.mxu0
      %v467 = vadd.f32 0.0, %v466
      %v468 = vpop.f32.mrf.mxu0
      %469 = vmatprep.mubr.f32.mxu0 0.0
      %470 = vmatmul.mubr.f32.gmra.mxu0 %v258
      %v471 = vpop.f32.mrf.mxu0
      %v472 = vadd.f32 0.0, %v471
      %v473 = vpop.f32.mrf.mxu0
      %474 = vmatprep.mubr.f32.mxu0 0.0
      %475 = vmatmul.mubr.f32.gmra.mxu0 %v261
      %v476 = vpop.f32.mrf.mxu0
      %v477 = vadd.f32 0.0, %v476
      %v478 = vpop.f32.mrf.mxu0
      %479 = vmatprep.mubr.f32.mxu0 0.0
      %480 = vmatmul.mubr.f32.gmra.mxu0 %v264
      %v481 = vpop.f32.mrf.mxu0
      %v482 = vadd.f32 0.0, %v481
      %v483 = vpop.f32.mrf.mxu0
      %484 = vmatprep.mubr.f32.mxu0 0.0
      %485 = vmatmul.mubr.f32.gmra.mxu0 %v267
      %v486 = vpop.f32.mrf.mxu0
      %v487 = vadd.f32 0.0, %v486
      %v488 = vpop.f32.mrf.mxu0
      %489 = vmatprep.mubr.f32.mxu0 0.0
      %490 = vmatmul.mubr.f32.gmra.mxu0 %v270
      %v491 = vpop.f32.mrf.mxu0
      %v492 = vadd.f32 0.0, %v491
      %v493 = vpop.f32.mrf.mxu0
      %494 = vmatprep.mubr.f32.mxu0 0.0
      %495 = vmatmul.mubr.f32.gmra.mxu0 %v273
      %v496 = vpop.f32.mrf.mxu0
      %v497 = vadd.f32 0.0, %v496
      %v498 = vpop.f32.mrf.mxu0
      %499 = vmatprep.mubr.f32.mxu0 0.0
      %500 = vmatmul.mubr.f32.gmra.mxu0 %v276
      %v501 = vpop.f32.mrf.mxu0
      %v502 = vadd.f32 0.0, %v501
      %v503 = vpop.f32.mrf.mxu0
      %504 = vmatprep.mubr.f32.mxu0 0.0
      %505 = vmatmul.mubr.f32.gmra.mxu0 %v279
      %v506 = vpop.f32.mrf.mxu0
      %v507 = vadd.f32 0.0, %v506
      %v508 = vpop.f32.mrf.mxu0
      %509 = vdwg.mxu0
      %510 = vst [vmem:[%s145] sm:$0xff] %v352
      %511 = vst [vmem:[%s145 + $0x8] sm:$0xff] %v357
      %512 = vst [vmem:[%s145 + $0x10] sm:$0xff] %v362
      %513 = vst [vmem:[%s145 + $0x18] sm:$0xff] %v367
      %514 = vst [vmem:[%s145 + $0x20] sm:$0xff] %v372
      %515 = vst [vmem:[%s145 + $0x28] sm:$0xff] %v377
      %516 = vst [vmem:[%s145 + $0x30] sm:$0xff] %v382
      %517 = vst [vmem:[%s145 + $0x38] sm:$0xff] %v387
      %518 = vst [vmem:[%s145 + $0x40] sm:$0xff] %v392
      %519 = vst [vmem:[%s145 + $0x48] sm:$0xff] %v397
      %520 = vst [vmem:[%s145 + $0x50] sm:$0xff] %v402
      %521 = vst [vmem:[%s145 + $0x58] sm:$0xff] %v407
      %522 = vst [vmem:[%s145 + $0x60] sm:$0xff] %v412
      %523 = vst [vmem:[%s145 + $0x68] sm:$0xff] %v417
      %524 = vst [vmem:[%s145 + $0x70] sm:$0xff] %v422
      %525 = vst [vmem:[%s145 + $0x78] sm:$0xff] %v427
      %526 = vst [vmem:[%s145 + $0x80] sm:$0xff] %v432
      %527 = vst [vmem:[%s145 + $0x88] sm:$0xff] %v437
      %528 = vst [vmem:[%s145 + $0x90] sm:$0xff] %v442
      %529 = vst [vmem:[%s145 + $0x98] sm:$0xff] %v447
      %530 = vst [vmem:[%s145 + $0xa0] sm:$0xff] %v452
      %531 = vst [vmem:[%s145 + $0xa8] sm:$0xff] %v457
      %532 = vst [vmem:[%s145 + $0xb0] sm:$0xff] %v462
      %533 = vst [vmem:[%s145 + $0xb8] sm:$0xff] %v467
      %534 = vst [vmem:[%s145 + $0xc0] sm:$0xff] %v472
      %535 = vst [vmem:[%s145 + $0xc8] sm:$0xff] %v477
      %536 = vst [vmem:[%s145 + $0xd0] sm:$0xff] %v482
      %537 = vst [vmem:[%s145 + $0xd8] sm:$0xff] %v487
      %538 = vst [vmem:[%s145 + $0xe0] sm:$0xff] %v492
      %539 = vst [vmem:[%s145 + $0xe8] sm:$0xff] %v497
      %540 = vst [vmem:[%s145 + $0xf0] sm:$0xff] %v502
      %541 = vst [vmem:[%s145 + $0xf8] sm:$0xff] %v507
      %s542 = smul.u32 32, %s13
      %p543 = scmp.lt.s32.totalorder %s542, 63
      %s544 = scalar_select %p543, %s542, 63
      %s545 = smul.addr %s544, 8
      %s546 = scalar_lea.vmem %s2, %s545
      // Predicated region
      $region29: #{gabor_conv2d_forward.3} parent=27 // pred_check
        %p547 = pneg %p78
      $region30: #{gabor_conv2d_forward.3} parent=27 // pred_check_branch
        %549 = sbr.rel (%p547) target = $region32
      $region31: #{gabor_conv2d_forward.3} parent=27 // pred_region
        %s550 = smul.u32 32, %s13
      $region32: #{gabor_conv2d_forward.3} parent=27 // pred_fallthru
        _
    $region28: #{gabor_conv2d_forward.3} parent=5 // pred_fallthru
      _
    %p551 = scmp.le.s32.totalorder 2, %s8
    // Predicated region
    $region33: #{gabor_conv2d_forward.3} parent=5 // pred_check
      %p552 = pneg %p551
    $region34: #{gabor_conv2d_forward.3} parent=5 // pred_check_branch
      %554 = sbr.rel (%p552) target = $region36
    $region35: #{gabor_conv2d_forward.3} parent=5 // pred_region
      %s555 = ssub.s32 %s8, 2
      // Predicated region
      $region37: #{gabor_conv2d_forward.3} parent=35 // pred_check
        %p556 = pneg %p84
      $region38: #{gabor_conv2d_forward.3} parent=35 // pred_check_branch
        %558 = sbr.rel (%p556) target = $region40
      $region39: #{gabor_conv2d_forward.3} parent=35 // pred_region
        %s559 = smul.u32 32, %s14
        %p560 = scmp.lt.s32.totalorder %s559, 63
        %s561 = scalar_select %p560, %s559, 63
        %s562 = smul.addr %s561, 8
        %s563 = scalar_lea.vmem %s2, %s562
      $region40: #{gabor_conv2d_forward.3} parent=35 // pred_fallthru
        _
    $region36: #{gabor_conv2d_forward.3} parent=5 // pred_fallthru
      _
  $region6: #{gabor_conv2d_forward.3} parent=0 // loop_footer
    %s12 = sadd.s32 1, %s8
  $region7: #{gabor_conv2d_forward.3} parent=0 // loop_footer_branch
    %7 = sbr.rel target = $region3
  $region8: #{gabor_conv2d_forward.3} parent=0 // loop_exit
    _

</llo_original>
